<compile_context>
chip_gen: v5e
topology: v5e:2x2
jax: 0.10.0
libtpu: 0.0.40
codegen_flags: <defaults>
</compile_context>

<pallas_src>
import functools

import jax
import jax.numpy as jnp
import numpy as np
from jax import lax
from jax.experimental import pallas as pl
from jax.experimental.pallas import tpu as pltpu


def gru_text_encoder_kernel(len_ref, emb_ref, wih_ref, whh_ref, bi_ref, bhn_ref,
                            out_ref, h_ref, gi_ref, mask_ref,
                            *, time_chunk, hidden_dim, normalise_out):
    """One grid step = one (batch block, time chunk).

    len_ref : (Bb, 1)        int32  sequence lengths for this batch block
    emb_ref : (Tc*Bb, E)     bf16   chunk embeddings, row = local_t*Bb + local_b
    wih_ref : (E, 3H)        bf16   fused input->hidden weights (gate cols r|z|n)
    whh_ref : (H, 3H)        bf16   fused hidden->hidden weights
    bi_ref  : (1, 3H)        f32    b_ih with b_hh[r], b_hh[z] folded in
    bhn_ref : (1, H)         f32    b_hh[n] (stays under the r* multiply)
    out_ref : (Bb, H)        f32    final hidden state (written at last chunk)
    h_ref   : (Bb, H)        f32    VMEM scratch: h carried across chunks
    gi_ref  : (Tc*Bb, 3H)    f32    VMEM scratch: fused input projections
    mask_ref: (Tc, Bb, H)    f32    VMEM scratch: validity mask per step
    """
    Tc = time_chunk
    H = hidden_dim
    Bb = h_ref.shape[0]
    t_chunk = pl.program_id(1)

    @pl.when(t_chunk == 0)
    def _():
        h_ref[...] = jnp.zeros_like(h_ref)

    # ---- chunk prologue: ONE fused bf16 matmul for all Tc steps & 3 gates ----
    gi_ref[...] = (jnp.dot(emb_ref[...], wih_ref[...],
                           preferred_element_type=jnp.float32)
                   + bi_ref[...])                       # r,z slices carry bi+bh

    # ---- precompute the freeze mask off the serial path ----
    g_step = t_chunk * Tc + lax.broadcasted_iota(jnp.int32, (Tc, Bb, H), 0)
    mask_ref[...] = (g_step < len_ref[...]).astype(jnp.float32)

    # ---- loop-invariant loads ----
    w_hh = whh_ref[...]                                 # (H, 3H) bf16
    b_hn = bhn_ref[...]                                 # (1, H)  f32

    def step(i, h):
        row0 = pl.multiple_of(i * Bb, 8)                # aligned sublane slice
        gi = gi_ref[pl.ds(row0, Bb), :]                 # (Bb, 3H)
        gh = jnp.dot(h.astype(jnp.bfloat16), w_hh,      # single matmul / step
                     preferred_element_type=jnp.float32)
        r = jax.nn.sigmoid(gi[:, 0:H] + gh[:, 0:H])
        z = jax.nn.sigmoid(gi[:, H:2 * H] + gh[:, H:2 * H])
        n = jnp.tanh(gi[:, 2 * H:3 * H] + r * (gh[:, 2 * H:3 * H] + b_hn))
        m = mask_ref[i]                                 # (Bb, H) f32
        # h_new = (1-z)*n + z*h, frozen once exhausted:  h + m*(1-z)*(n-h)
        return h + (m * (1.0 - z)) * (n - h)

    # Full unroll only over the tiny per-chunk trip count (Tc).
    h_ref[...] = lax.fori_loop(0, Tc, step, h_ref[...], unroll=True)

    @pl.when(t_chunk == pl.num_programs(1) - 1)
    def _():
        h_last = h_ref[...]
        if normalise_out:
            # Matches reference normalise(): divide by sqrt(sum sq), no eps.
            ssq = jnp.sum(h_last * h_last, axis=1, keepdims=True)
            h_last = h_last * lax.rsqrt(ssq)            # EUP rsqrt, no divide
        out_ref[...] = h_last


def prepare_kernel_params(params):
    """PyTorch-layout GRU params -> fused, lane-aligned kernel layouts."""
    H = params["w_hh"].shape[1]
    bi, bh = params["b_ih"], params["b_hh"]
    b_fused = jnp.concatenate([bi[0:H] + bh[0:H],          # r: fold b_hh
                               bi[H:2 * H] + bh[H:2 * H],  # z: fold b_hh
                               bi[2 * H:3 * H]], axis=0)   # n: b_ih only
    return {
        "w_ih": params["w_ih"].T.astype(jnp.bfloat16),     # (E, 3H)
        "w_hh": params["w_hh"].T.astype(jnp.bfloat16),     # (H, 3H)
        "b_i": b_fused.reshape(1, 3 * H).astype(jnp.float32),
        "b_hn": bh[2 * H:3 * H].reshape(1, H).astype(jnp.float32),
    }


def text_encoder_forward(params, inputs, lengths, *, normalise_out,
                         batch_block=8, time_chunk=4):
    """JAX wrapper reproducing TextEncoder.forward."""
    B, T = inputs.shape
    E = params["w_ih"].shape[1]
    H = params["w_hh"].shape[1]
    Bb, Tc = batch_block, time_chunk
    assert B % Bb == 0 and Bb % 8 == 0
    assert T % Tc == 0
    assert H % 128 == 0, "keep H lane-dense (multiple of 128)"
    nb, ntc = B // Bb, T // Tc

    kp = prepare_kernel_params(params)   # in practice: prepare once, reuse

    # Arrange token ids so each (batch block, time chunk) grid cell reads a
    # contiguous flat (Tc*Bb, E) slab (row = local_t*Bb + local_b) — no
    # in-kernel reshape of the embedding block.
    ids = (inputs.T.reshape(ntc, Tc, nb, Bb)
           .transpose(2, 0, 1, 3)
           .reshape(nb, ntc, Tc * Bb))
    # bf16 gather output: halves HBM traffic and feeds the MXU natively.
    emb = jnp.take(params["embedding"], ids, axis=0).astype(jnp.bfloat16)

    len2d = lengths.astype(jnp.int32).reshape(B, 1)

    kernel = functools.partial(gru_text_encoder_kernel, time_chunk=Tc,
                               hidden_dim=H, normalise_out=normalise_out)

    # Explicit scoped-VMEM budget (blocks + scratch, x2 headroom, <= v7x 64 MiB).
    bf2, f4 = 2, 4
    need = (2 * Tc * Bb * E * bf2                 # emb block, double-buffered
            + 2 * Bb * 1 * 4                      # lengths block
            + (E + H) * 3 * H * bf2               # fused weights
            + (3 * H + H) * f4                    # biases
            + 2 * Bb * H * f4                     # out block
            + Bb * H * f4                         # h carry scratch
            + Tc * Bb * 3 * H * f4                # gi scratch
            + Tc * Bb * H * f4)                   # mask scratch
    vmem_limit = int(min(64 * 2 ** 20, max(16 * 2 ** 20, 2 * need + (2 << 20))))

    out = pl.pallas_call(
        kernel,
        out_shape=jax.ShapeDtypeStruct((B, H), jnp.float32),
        grid=(nb, ntc),
        in_specs=[
            pl.BlockSpec((Bb, 1), lambda b, t: (b, 0)),                   # lengths
            pl.BlockSpec((None, None, Tc * Bb, E), lambda b, t: (b, t, 0, 0)),  # emb
            pl.BlockSpec((E, 3 * H), lambda b, t: (0, 0)),                # W_ih fused
            pl.BlockSpec((H, 3 * H), lambda b, t: (0, 0)),                # W_hh fused
            pl.BlockSpec((1, 3 * H), lambda b, t: (0, 0)),                # bias (folded)
            pl.BlockSpec((1, H), lambda b, t: (0, 0)),                    # b_hh[n]
        ],
        out_specs=pl.BlockSpec((Bb, H), lambda b, t: (b, 0)),
        scratch_shapes=[
            pltpu.VMEM((Bb, H), jnp.float32),            # h carried across chunks
            pltpu.VMEM((Tc * Bb, 3 * H), jnp.float32),   # fused input projections
            pltpu.VMEM((Tc, Bb, H), jnp.float32),        # validity mask
        ],
        compiler_params=pltpu.CompilerParams(
            dimension_semantics=("parallel", "arbitrary"),
            vmem_limit_bytes=vmem_limit),
    )(len2d, emb, kp["w_ih"], kp["w_hh"], kp["b_i"], kp["b_hn"])
    return out


def reference_forward(params, inputs, lengths, normalise_out):
    """Pure-JAX f32 reference mirroring the PyTorch module (PyTorch layouts)."""
    emb = jnp.take(params["embedding"], inputs, axis=0)          # (B, T, E)
    Wi, Wh = params["w_ih"], params["w_hh"]                      # (3H,E), (3H,H)
    bi, bh = params["b_ih"], params["b_hh"]                      # (3H,)
    B, T, E = emb.shape
    H = Wh.shape[1]

    def step(h, x_t):
        gi = x_t @ Wi.T + bi
        gh = h @ Wh.T + bh
        r = jax.nn.sigmoid(gi[:, :H] + gh[:, :H])
        z = jax.nn.sigmoid(gi[:, H:2 * H] + gh[:, H:2 * H])
        n = jnp.tanh(gi[:, 2 * H:] + r * gh[:, 2 * H:])
        h_new = (1.0 - z) * n + z * h
        return h_new, h_new

    _, hs = lax.scan(step, jnp.zeros((B, H), jnp.float32),
                     jnp.transpose(emb, (1, 0, 2)))
    hs = jnp.transpose(hs, (1, 0, 2))                            # (B, T, H)
    out = hs[jnp.arange(B), lengths - 1]
    if normalise_out:
        out = out / jnp.sqrt(jnp.sum(out ** 2, axis=1, keepdims=True))
    return out


def init_params(key, vocab_size, word_embedding_dim, embedding_dim):
    """Deterministic init matching nn.Embedding / nn.GRU defaults (PyTorch layouts)."""
    k_emb, k_wih, k_whh, k_bih, k_bhh = jax.random.split(key, 5)
    H, E = embedding_dim, word_embedding_dim
    bound = 1.0 / np.sqrt(H)
    return {
        "embedding": jax.random.uniform(k_emb, (vocab_size, E), jnp.float32,
                                        -0.1, 0.1),
        "w_ih": jax.random.uniform(k_wih, (3 * H, E), jnp.float32, -bound, bound),
        "w_hh": jax.random.uniform(k_whh, (3 * H, H), jnp.float32, -bound, bound),
        "b_ih": jax.random.uniform(k_bih, (3 * H,), jnp.float32, -bound, bound),
        "b_hh": jax.random.uniform(k_bhh, (3 * H,), jnp.float32, -bound, bound),
    }


if __name__ == "__main__":
    # Small shapes consistent with the module (H lane-dense, B split over 2 blocks).
    B, T = 16, 8
    vocab_size = 50
    word_embedding_dim = 64      # E
    embedding_dim = 128          # H (GRU hidden == output embedding dim)
    normalise_out = True

    key = jax.random.PRNGKey(0)
    k_params, k_inp, k_len = jax.random.split(key, 3)

    params = init_params(k_params, vocab_size, word_embedding_dim, embedding_dim)
    inputs = jax.random.randint(k_inp, (B, T), 0, vocab_size, dtype=jnp.int32)
    lengths = jax.random.randint(k_len, (B,), 1, T + 1, dtype=jnp.int32)

    out = text_encoder_forward(params, inputs, lengths,
                               normalise_out=normalise_out,
                               batch_block=8, time_chunk=4)
    out = jax.block_until_ready(out)

    ref = reference_forward(params, inputs, lengths, normalise_out)
    # Tolerance loosened vs. the pure-f32 version: kernel matmuls run in bf16
    # (f32 accumulation) per the perf review.
    np.testing.assert_allclose(np.asarray(out), np.asarray(ref),
                               rtol=2e-2, atol=2e-2)

    print("KERNEL_OK")
</pallas_src>

<mosaic_0001>
module attributes {stable_mosaic.version = 11 : i64} {
  func.func @gru_text_encoder_kernel(%arg0: i32, %arg1: i32, %arg2: memref<8x1xi32, #tpu.memory_space<vmem>>, %arg3: memref<1x1x32x64xbf16, #tpu.memory_space<vmem>>, %arg4: memref<64x384xbf16, #tpu.memory_space<vmem>>, %arg5: memref<128x384xbf16, #tpu.memory_space<vmem>>, %arg6: memref<1x384xf32, #tpu.memory_space<vmem>>, %arg7: memref<1x128xf32, #tpu.memory_space<vmem>>, %arg8: memref<8x128xf32, #tpu.memory_space<vmem>>, %arg9: memref<8x128xf32, #tpu.memory_space<vmem>>, %arg10: memref<32x384xf32, #tpu.memory_space<vmem>>, %arg11: memref<4x8x128xf32, #tpu.memory_space<vmem>>) attributes {dimension_semantics = [#tpu.dimension_semantics<parallel>, #tpu.dimension_semantics<arbitrary>], iteration_bounds = array<i64: 2, 2>, scalar_prefetch = 0 : i64, scratch_operands = 3 : i64, tpu.core_type = #tpu.core_type<tc>, window_params = [{transform_indices = @transform_0, window_bounds = array<i64: 8, 1>}, {transform_indices = @transform_1, window_bounds = array<i64: 1, 1, 32, 64>}, {pipeline_mode = #tpu.pipeline_mode<synchronous>, transform_indices = @transform_2, window_bounds = array<i64: 64, 384>}, {pipeline_mode = #tpu.pipeline_mode<synchronous>, transform_indices = @transform_3, window_bounds = array<i64: 128, 384>}, {pipeline_mode = #tpu.pipeline_mode<synchronous>, transform_indices = @transform_4, window_bounds = array<i64: 1, 384>}, {pipeline_mode = #tpu.pipeline_mode<synchronous>, transform_indices = @transform_5, window_bounds = array<i64: 1, 128>}, {transform_indices = @transform_6, window_bounds = array<i64: 8, 128>}]} {
    %c0_i32 = arith.constant 0 : i32
    %0 = arith.cmpi eq, %arg1, %c0_i32 : i32
    %1 = arith.extui %0 : i1 to i32
    %c0_i32_0 = arith.constant 0 : i32
    %2 = arith.cmpi ne, %1, %c0_i32_0 : i32
    scf.if %2 {
      %cst_58 = arith.constant 0.000000e+00 : f32
      %181 = vector.broadcast %cst_58 : f32 to vector<8x128xf32>
      %c0_59 = arith.constant 0 : index
      %c0_60 = arith.constant 0 : index
      %182 = vector.load %arg9[%c0_59, %c0_60] : memref<8x128xf32, #tpu.memory_space<vmem>>, vector<8x128xf32>
      tpu.vector_store %arg9[%c0_59, %c0_60], %181 {strides = array<i32>} : memref<8x128xf32, #tpu.memory_space<vmem>>, vector<8x128xf32>,
    } else {
    }
    %c0 = arith.constant 0 : index
    %c0_1 = arith.constant 0 : index
    %c0_2 = arith.constant 0 : index
    %c0_3 = arith.constant 0 : index
    %3 = vector.load %arg3[%c0, %c0_1, %c0_2, %c0_3] : memref<1x1x32x64xbf16, #tpu.memory_space<vmem>>, vector<1x1x32x64xbf16>
    %4 = vector.shape_cast %3 : vector<1x1x32x64xbf16> to vector<32x64xbf16>
    %c0_4 = arith.constant 0 : index
    %c0_5 = arith.constant 0 : index
    %5 = vector.load %arg4[%c0_4, %c0_5] : memref<64x384xbf16, #tpu.memory_space<vmem>>, vector<64x384xbf16>
    %cst = arith.constant dense<0.000000e+00> : vector<32x384xf32>
    %6 = tpu.matmul %4, %5, %cst {dimension_numbers = #tpu.dot_dimension_numbers<[1], [0], [0], [1], [0, 0, 1, 1], [], []>} : vector<32x64xbf16>, vector<64x384xbf16>, vector<32x384xf32> -> vector<32x384xf32>
    %c0_6 = arith.constant 0 : index
    %c0_7 = arith.constant 0 : index
    %7 = vector.load %arg6[%c0_6, %c0_7] : memref<1x384xf32, #tpu.memory_space<vmem>>, vector<1x384xf32>
    %8 = vector.broadcast %7 : vector<1x384xf32> to vector<32x384xf32>
    %9 = arith.addf %6, %8 : vector<32x384xf32>
    %c0_8 = arith.constant 0 : index
    %c0_9 = arith.constant 0 : index
    %10 = vector.load %arg10[%c0_8, %c0_9] : memref<32x384xf32, #tpu.memory_space<vmem>>, vector<32x384xf32>
    tpu.vector_store %arg10[%c0_8, %c0_9], %9 {strides = array<i32>} : memref<32x384xf32, #tpu.memory_space<vmem>>, vector<32x384xf32>,
    %c4_i32 = arith.constant 4 : i32
    %11 = arith.muli %arg1, %c4_i32 : i32
    %12 = tpu.iota {dimensions = array<i32: 0>} : vector<4x8x128xi32>
    %13 = vector.broadcast %11 : i32 to vector<4x8x128xi32>
    %14 = arith.addi %13, %12 : vector<4x8x128xi32>
    %c0_10 = arith.constant 0 : index
    %c0_11 = arith.constant 0 : index
    %15 = vector.load %arg2[%c0_10, %c0_11] : memref<8x1xi32, #tpu.memory_space<vmem>>, vector<8x1xi32>
    %16 = vector.shape_cast %15 : vector<8x1xi32> to vector<1x8x1xi32>
    %17 = vector.broadcast %16 : vector<1x8x1xi32> to vector<4x8x128xi32>
    %18 = arith.cmpi slt, %14, %17 : vector<4x8x128xi32>
    %19 = arith.extui %18 : vector<4x8x128xi1> to vector<4x8x128xi32>
    %20 = arith.sitofp %19 : vector<4x8x128xi32> to vector<4x8x128xf32>
    %c0_12 = arith.constant 0 : index
    %c0_13 = arith.constant 0 : index
    %c0_14 = arith.constant 0 : index
    %21 = vector.load %arg11[%c0_12, %c0_13, %c0_14] : memref<4x8x128xf32, #tpu.memory_space<vmem>>, vector<4x8x128xf32>
    tpu.vector_store %arg11[%c0_12, %c0_13, %c0_14], %20 {strides = array<i32>} : memref<4x8x128xf32, #tpu.memory_space<vmem>>, vector<4x8x128xf32>,
    %c0_15 = arith.constant 0 : index
    %c0_16 = arith.constant 0 : index
    %22 = vector.load %arg5[%c0_15, %c0_16] : memref<128x384xbf16, #tpu.memory_space<vmem>>, vector<128x384xbf16>
    %c0_17 = arith.constant 0 : index
    %c0_18 = arith.constant 0 : index
    %23 = vector.load %arg7[%c0_17, %c0_18] : memref<1x128xf32, #tpu.memory_space<vmem>>, vector<1x128xf32>
    %c0_19 = arith.constant 0 : index
    %c0_20 = arith.constant 0 : index
    %24 = vector.load %arg9[%c0_19, %c0_20] : memref<8x128xf32, #tpu.memory_space<vmem>>, vector<8x128xf32>
    %c0_i32_21 = arith.constant 0 : i32
    %c8_i32 = arith.constant 8 : i32
    %25 = arith.muli %c0_i32_21, %c8_i32 : i32
    %26 = tpu.assume_multiple %25, 8 : i32
    %27 = arith.index_cast %26 : i32 to index
    %c0_22 = arith.constant 0 : index
    %28 = vector.load %arg10[%27, %c0_22] : memref<32x384xf32, #tpu.memory_space<vmem>>, vector<8x384xf32>
    %29 = arith.truncf %24 : vector<8x128xf32> to vector<8x128xbf16>
    %cst_23 = arith.constant dense<0.000000e+00> : vector<8x384xf32>
    %30 = tpu.matmul %29, %22, %cst_23 {dimension_numbers = #tpu.dot_dimension_numbers<[1], [0], [0], [1], [0, 0, 1, 1], [], []>} : vector<8x128xbf16>, vector<128x384xbf16>, vector<8x384xf32> -> vector<8x384xf32>
    %31 = vector.extract_strided_slice %28 {offsets = [0, 0], sizes = [8, 128], strides = [1, 1]} : vector<8x384xf32> to vector<8x128xf32>
    %32 = vector.extract_strided_slice %30 {offsets = [0, 0], sizes = [8, 128], strides = [1, 1]} : vector<8x384xf32> to vector<8x128xf32>
    %33 = arith.addf %31, %32 : vector<8x128xf32>
    %34 = arith.negf %33 : vector<8x128xf32>
    %35 = math.exp %34 : vector<8x128xf32>
    %cst_24 = arith.constant 1.000000e+00 : f32
    %36 = vector.broadcast %cst_24 : f32 to vector<8x128xf32>
    %37 = arith.addf %36, %35 : vector<8x128xf32>
    %38 = arith.divf %36, %37 : vector<8x128xf32>
    %39 = vector.extract_strided_slice %28 {offsets = [0, 128], sizes = [8, 128], strides = [1, 1]} : vector<8x384xf32> to vector<8x128xf32>
    %40 = vector.extract_strided_slice %30 {offsets = [0, 128], sizes = [8, 128], strides = [1, 1]} : vector<8x384xf32> to vector<8x128xf32>
    %41 = arith.addf %39, %40 : vector<8x128xf32>
    %42 = arith.negf %41 : vector<8x128xf32>
    %43 = math.exp %42 : vector<8x128xf32>
    %cst_25 = arith.constant 1.000000e+00 : f32
    %44 = vector.broadcast %cst_25 : f32 to vector<8x128xf32>
    %45 = arith.addf %44, %43 : vector<8x128xf32>
    %46 = arith.divf %44, %45 : vector<8x128xf32>
    %47 = vector.extract_strided_slice %28 {offsets = [0, 256], sizes = [8, 128], strides = [1, 1]} : vector<8x384xf32> to vector<8x128xf32>
    %48 = vector.extract_strided_slice %30 {offsets = [0, 256], sizes = [8, 128], strides = [1, 1]} : vector<8x384xf32> to vector<8x128xf32>
    %49 = vector.broadcast %23 : vector<1x128xf32> to vector<8x128xf32>
    %50 = arith.addf %48, %49 : vector<8x128xf32>
    %51 = arith.mulf %38, %50 : vector<8x128xf32>
    %52 = arith.addf %47, %51 : vector<8x128xf32>
    %53 = math.tanh %52 : vector<8x128xf32>
    %54 = arith.index_cast %c0_i32_21 : i32 to index
    %c0_26 = arith.constant 0 : index
    %c0_27 = arith.constant 0 : index
    %55 = vector.load %arg11[%54, %c0_26, %c0_27] : memref<4x8x128xf32, #tpu.memory_space<vmem>>, vector<1x8x128xf32>
    %56 = vector.shape_cast %55 : vector<1x8x128xf32> to vector<8x128xf32>
    %cst_28 = arith.constant 1.000000e+00 : f32
    %57 = vector.broadcast %cst_28 : f32 to vector<8x128xf32>
    %58 = arith.subf %57, %46 : vector<8x128xf32>
    %59 = arith.mulf %56, %58 : vector<8x128xf32>
    %60 = arith.subf %53, %24 : vector<8x128xf32>
    %61 = arith.mulf %59, %60 : vector<8x128xf32>
    %62 = arith.addf %24, %61 : vector<8x128xf32>
    %c1_i32 = arith.constant 1 : i32
    %c8_i32_29 = arith.constant 8 : i32
    %63 = arith.muli %c1_i32, %c8_i32_29 : i32
    %64 = tpu.assume_multiple %63, 8 : i32
    %65 = arith.index_cast %64 : i32 to index
    %c0_30 = arith.constant 0 : index
    %66 = vector.load %arg10[%65, %c0_30] : memref<32x384xf32, #tpu.memory_space<vmem>>, vector<8x384xf32>
    %67 = arith.truncf %62 : vector<8x128xf32> to vector<8x128xbf16>
    %cst_31 = arith.constant dense<0.000000e+00> : vector<8x384xf32>
    %68 = tpu.matmul %67, %22, %cst_31 {dimension_numbers = #tpu.dot_dimension_numbers<[1], [0], [0], [1], [0, 0, 1, 1], [], []>} : vector<8x128xbf16>, vector<128x384xbf16>, vector<8x384xf32> -> vector<8x384xf32>
    %69 = vector.extract_strided_slice %66 {offsets = [0, 0], sizes = [8, 128], strides = [1, 1]} : vector<8x384xf32> to vector<8x128xf32>
    %70 = vector.extract_strided_slice %68 {offsets = [0, 0], sizes = [8, 128], strides = [1, 1]} : vector<8x384xf32> to vector<8x128xf32>
    %71 = arith.addf %69, %70 : vector<8x128xf32>
    %72 = arith.negf %71 : vector<8x128xf32>
    %73 = math.exp %72 : vector<8x128xf32>
    %cst_32 = arith.constant 1.000000e+00 : f32
    %74 = vector.broadcast %cst_32 : f32 to vector<8x128xf32>
    %75 = arith.addf %74, %73 : vector<8x128xf32>
    %76 = arith.divf %74, %75 : vector<8x128xf32>
    %77 = vector.extract_strided_slice %66 {offsets = [0, 128], sizes = [8, 128], strides = [1, 1]} : vector<8x384xf32> to vector<8x128xf32>
    %78 = vector.extract_strided_slice %68 {offsets = [0, 128], sizes = [8, 128], strides = [1, 1]} : vector<8x384xf32> to vector<8x128xf32>
    %79 = arith.addf %77, %78 : vector<8x128xf32>
    %80 = arith.negf %79 : vector<8x128xf32>
    %81 = math.exp %80 : vector<8x128xf32>
    %cst_33 = arith.constant 1.000000e+00 : f32
    %82 = vector.broadcast %cst_33 : f32 to vector<8x128xf32>
    %83 = arith.addf %82, %81 : vector<8x128xf32>
    %84 = arith.divf %82, %83 : vector<8x128xf32>
    %85 = vector.extract_strided_slice %66 {offsets = [0, 256], sizes = [8, 128], strides = [1, 1]} : vector<8x384xf32> to vector<8x128xf32>
    %86 = vector.extract_strided_slice %68 {offsets = [0, 256], sizes = [8, 128], strides = [1, 1]} : vector<8x384xf32> to vector<8x128xf32>
    %87 = vector.broadcast %23 : vector<1x128xf32> to vector<8x128xf32>
    %88 = arith.addf %86, %87 : vector<8x128xf32>
    %89 = arith.mulf %76, %88 : vector<8x128xf32>
    %90 = arith.addf %85, %89 : vector<8x128xf32>
    %91 = math.tanh %90 : vector<8x128xf32>
    %92 = arith.index_cast %c1_i32 : i32 to index
    %c0_34 = arith.constant 0 : index
    %c0_35 = arith.constant 0 : index
    %93 = vector.load %arg11[%92, %c0_34, %c0_35] : memref<4x8x128xf32, #tpu.memory_space<vmem>>, vector<1x8x128xf32>
    %94 = vector.shape_cast %93 : vector<1x8x128xf32> to vector<8x128xf32>
    %cst_36 = arith.constant 1.000000e+00 : f32
    %95 = vector.broadcast %cst_36 : f32 to vector<8x128xf32>
    %96 = arith.subf %95, %84 : vector<8x128xf32>
    %97 = arith.mulf %94, %96 : vector<8x128xf32>
    %98 = arith.subf %91, %62 : vector<8x128xf32>
    %99 = arith.mulf %97, %98 : vector<8x128xf32>
    %100 = arith.addf %62, %99 : vector<8x128xf32>
    %c2_i32 = arith.constant 2 : i32
    %c8_i32_37 = arith.constant 8 : i32
    %101 = arith.muli %c2_i32, %c8_i32_37 : i32
    %102 = tpu.assume_multiple %101, 8 : i32
    %103 = arith.index_cast %102 : i32 to index
    %c0_38 = arith.constant 0 : index
    %104 = vector.load %arg10[%103, %c0_38] : memref<32x384xf32, #tpu.memory_space<vmem>>, vector<8x384xf32>
    %105 = arith.truncf %100 : vector<8x128xf32> to vector<8x128xbf16>
    %cst_39 = arith.constant dense<0.000000e+00> : vector<8x384xf32>
    %106 = tpu.matmul %105, %22, %cst_39 {dimension_numbers = #tpu.dot_dimension_numbers<[1], [0], [0], [1], [0, 0, 1, 1], [], []>} : vector<8x128xbf16>, vector<128x384xbf16>, vector<8x384xf32> -> vector<8x384xf32>
    %107 = vector.extract_strided_slice %104 {offsets = [0, 0], sizes = [8, 128], strides = [1, 1]} : vector<8x384xf32> to vector<8x128xf32>
    %108 = vector.extract_strided_slice %106 {offsets = [0, 0], sizes = [8, 128], strides = [1, 1]} : vector<8x384xf32> to vector<8x128xf32>
    %109 = arith.addf %107, %108 : vector<8x128xf32>
    %110 = arith.negf %109 : vector<8x128xf32>
    %111 = math.exp %110 : vector<8x128xf32>
    %cst_40 = arith.constant 1.000000e+00 : f32
    %112 = vector.broadcast %cst_40 : f32 to vector<8x128xf32>
    %113 = arith.addf %112, %111 : vector<8x128xf32>
    %114 = arith.divf %112, %113 : vector<8x128xf32>
    %115 = vector.extract_strided_slice %104 {offsets = [0, 128], sizes = [8, 128], strides = [1, 1]} : vector<8x384xf32> to vector<8x128xf32>
    %116 = vector.extract_strided_slice %106 {offsets = [0, 128], sizes = [8, 128], strides = [1, 1]} : vector<8x384xf32> to vector<8x128xf32>
    %117 = arith.addf %115, %116 : vector<8x128xf32>
    %118 = arith.negf %117 : vector<8x128xf32>
    %119 = math.exp %118 : vector<8x128xf32>
    %cst_41 = arith.constant 1.000000e+00 : f32
    %120 = vector.broadcast %cst_41 : f32 to vector<8x128xf32>
    %121 = arith.addf %120, %119 : vector<8x128xf32>
    %122 = arith.divf %120, %121 : vector<8x128xf32>
    %123 = vector.extract_strided_slice %104 {offsets = [0, 256], sizes = [8, 128], strides = [1, 1]} : vector<8x384xf32> to vector<8x128xf32>
    %124 = vector.extract_strided_slice %106 {offsets = [0, 256], sizes = [8, 128], strides = [1, 1]} : vector<8x384xf32> to vector<8x128xf32>
    %125 = vector.broadcast %23 : vector<1x128xf32> to vector<8x128xf32>
    %126 = arith.addf %124, %125 : vector<8x128xf32>
    %127 = arith.mulf %114, %126 : vector<8x128xf32>
    %128 = arith.addf %123, %127 : vector<8x128xf32>
    %129 = math.tanh %128 : vector<8x128xf32>
    %130 = arith.index_cast %c2_i32 : i32 to index
    %c0_42 = arith.constant 0 : index
    %c0_43 = arith.constant 0 : index
    %131 = vector.load %arg11[%130, %c0_42, %c0_43] : memref<4x8x128xf32, #tpu.memory_space<vmem>>, vector<1x8x128xf32>
    %132 = vector.shape_cast %131 : vector<1x8x128xf32> to vector<8x128xf32>
    %cst_44 = arith.constant 1.000000e+00 : f32
    %133 = vector.broadcast %cst_44 : f32 to vector<8x128xf32>
    %134 = arith.subf %133, %122 : vector<8x128xf32>
    %135 = arith.mulf %132, %134 : vector<8x128xf32>
    %136 = arith.subf %129, %100 : vector<8x128xf32>
    %137 = arith.mulf %135, %136 : vector<8x128xf32>
    %138 = arith.addf %100, %137 : vector<8x128xf32>
    %c3_i32 = arith.constant 3 : i32
    %c8_i32_45 = arith.constant 8 : i32
    %139 = arith.muli %c3_i32, %c8_i32_45 : i32
    %140 = tpu.assume_multiple %139, 8 : i32
    %141 = arith.index_cast %140 : i32 to index
    %c0_46 = arith.constant 0 : index
    %142 = vector.load %arg10[%141, %c0_46] : memref<32x384xf32, #tpu.memory_space<vmem>>, vector<8x384xf32>
    %143 = arith.truncf %138 : vector<8x128xf32> to vector<8x128xbf16>
    %cst_47 = arith.constant dense<0.000000e+00> : vector<8x384xf32>
    %144 = tpu.matmul %143, %22, %cst_47 {dimension_numbers = #tpu.dot_dimension_numbers<[1], [0], [0], [1], [0, 0, 1, 1], [], []>} : vector<8x128xbf16>, vector<128x384xbf16>, vector<8x384xf32> -> vector<8x384xf32>
    %145 = vector.extract_strided_slice %142 {offsets = [0, 0], sizes = [8, 128], strides = [1, 1]} : vector<8x384xf32> to vector<8x128xf32>
    %146 = vector.extract_strided_slice %144 {offsets = [0, 0], sizes = [8, 128], strides = [1, 1]} : vector<8x384xf32> to vector<8x128xf32>
    %147 = arith.addf %145, %146 : vector<8x128xf32>
    %148 = arith.negf %147 : vector<8x128xf32>
    %149 = math.exp %148 : vector<8x128xf32>
    %cst_48 = arith.constant 1.000000e+00 : f32
    %150 = vector.broadcast %cst_48 : f32 to vector<8x128xf32>
    %151 = arith.addf %150, %149 : vector<8x128xf32>
    %152 = arith.divf %150, %151 : vector<8x128xf32>
    %153 = vector.extract_strided_slice %142 {offsets = [0, 128], sizes = [8, 128], strides = [1, 1]} : vector<8x384xf32> to vector<8x128xf32>
    %154 = vector.extract_strided_slice %144 {offsets = [0, 128], sizes = [8, 128], strides = [1, 1]} : vector<8x384xf32> to vector<8x128xf32>
    %155 = arith.addf %153, %154 : vector<8x128xf32>
    %156 = arith.negf %155 : vector<8x128xf32>
    %157 = math.exp %156 : vector<8x128xf32>
    %cst_49 = arith.constant 1.000000e+00 : f32
    %158 = vector.broadcast %cst_49 : f32 to vector<8x128xf32>
    %159 = arith.addf %158, %157 : vector<8x128xf32>
    %160 = arith.divf %158, %159 : vector<8x128xf32>
    %161 = vector.extract_strided_slice %142 {offsets = [0, 256], sizes = [8, 128], strides = [1, 1]} : vector<8x384xf32> to vector<8x128xf32>
    %162 = vector.extract_strided_slice %144 {offsets = [0, 256], sizes = [8, 128], strides = [1, 1]} : vector<8x384xf32> to vector<8x128xf32>
    %163 = vector.broadcast %23 : vector<1x128xf32> to vector<8x128xf32>
    %164 = arith.addf %162, %163 : vector<8x128xf32>
    %165 = arith.mulf %152, %164 : vector<8x128xf32>
    %166 = arith.addf %161, %165 : vector<8x128xf32>
    %167 = math.tanh %166 : vector<8x128xf32>
    %168 = arith.index_cast %c3_i32 : i32 to index
    %c0_50 = arith.constant 0 : index
    %c0_51 = arith.constant 0 : index
    %169 = vector.load %arg11[%168, %c0_50, %c0_51] : memref<4x8x128xf32, #tpu.memory_space<vmem>>, vector<1x8x128xf32>
    %170 = vector.shape_cast %169 : vector<1x8x128xf32> to vector<8x128xf32>
    %cst_52 = arith.constant 1.000000e+00 : f32
    %171 = vector.broadcast %cst_52 : f32 to vector<8x128xf32>
    %172 = arith.subf %171, %160 : vector<8x128xf32>
    %173 = arith.mulf %170, %172 : vector<8x128xf32>
    %174 = arith.subf %167, %138 : vector<8x128xf32>
    %175 = arith.mulf %173, %174 : vector<8x128xf32>
    %176 = arith.addf %138, %175 : vector<8x128xf32>
    %c4_i32_53 = arith.constant 4 : i32
    %c0_54 = arith.constant 0 : index
    %c0_55 = arith.constant 0 : index
    %177 = vector.load %arg9[%c0_54, %c0_55] : memref<8x128xf32, #tpu.memory_space<vmem>>, vector<8x128xf32>
    tpu.vector_store %arg9[%c0_54, %c0_55], %176 {strides = array<i32>} : memref<8x128xf32, #tpu.memory_space<vmem>>, vector<8x128xf32>,
    %c1_i32_56 = arith.constant 1 : i32
    %178 = arith.cmpi eq, %arg1, %c1_i32_56 : i32
    %179 = arith.extui %178 : i1 to i32
    %c0_i32_57 = arith.constant 0 : i32
    %180 = arith.cmpi ne, %179, %c0_i32_57 : i32
    scf.if %180 {
      %c0_58 = arith.constant 0 : index
      %c0_59 = arith.constant 0 : index
      %181 = vector.load %arg9[%c0_58, %c0_59] : memref<8x128xf32, #tpu.memory_space<vmem>>, vector<8x128xf32>
      %182 = arith.mulf %181, %181 : vector<8x128xf32>
      %cst_60 = arith.constant dense<0.000000e+00> : vector<8xf32>
      %183 = vector.multi_reduction <add>, %182, %cst_60 [1] : vector<8x128xf32> to vector<8xf32>
      %184 = vector.shape_cast %183 : vector<8xf32> to vector<8x1xf32>
      %185 = math.rsqrt %184 : vector<8x1xf32>
      %186 = vector.broadcast %185 : vector<8x1xf32> to vector<8x128xf32>
      %187 = arith.mulf %181, %186 : vector<8x128xf32>
      %c0_61 = arith.constant 0 : index
      %c0_62 = arith.constant 0 : index
      %188 = vector.load %arg8[%c0_61, %c0_62] : memref<8x128xf32, #tpu.memory_space<vmem>>, vector<8x128xf32>
      tpu.vector_store %arg8[%c0_61, %c0_62], %187 {strides = array<i32>} : memref<8x128xf32, #tpu.memory_space<vmem>>, vector<8x128xf32>,
    } else {
    }
    return
  }
  func.func @transform_0(%arg0: i32, %arg1: i32) -> (i32, i32) {
    %c0_i32 = arith.constant 0 : i32
    %c0_i32_0 = arith.constant 0 : i32
    return %arg0, %c0_i32 : i32, i32
  }
  func.func @transform_1(%arg0: i32, %arg1: i32) -> (i32, i32, i32, i32) {
    %c0_i32 = arith.constant 0 : i32
    %c0_i32_0 = arith.constant 0 : i32
    %c0_i32_1 = arith.constant 0 : i32
    return %arg0, %arg1, %c0_i32, %c0_i32_0 : i32, i32, i32, i32
  }
  func.func @transform_2(%arg0: i32, %arg1: i32) -> (i32, i32) {
    %c0_i32 = arith.constant 0 : i32
    %c0_i32_0 = arith.constant 0 : i32
    %c0_i32_1 = arith.constant 0 : i32
    return %c0_i32, %c0_i32_0 : i32, i32
  }
  func.func @transform_3(%arg0: i32, %arg1: i32) -> (i32, i32) {
    %c0_i32 = arith.constant 0 : i32
    %c0_i32_0 = arith.constant 0 : i32
    %c0_i32_1 = arith.constant 0 : i32
    return %c0_i32, %c0_i32_0 : i32, i32
  }
  func.func @transform_4(%arg0: i32, %arg1: i32) -> (i32, i32) {
    %c0_i32 = arith.constant 0 : i32
    %c0_i32_0 = arith.constant 0 : i32
    %c0_i32_1 = arith.constant 0 : i32
    return %c0_i32, %c0_i32_0 : i32, i32
  }
  func.func @transform_5(%arg0: i32, %arg1: i32) -> (i32, i32) {
    %c0_i32 = arith.constant 0 : i32
    %c0_i32_0 = arith.constant 0 : i32
    %c0_i32_1 = arith.constant 0 : i32
    return %c0_i32, %c0_i32_0 : i32, i32
  }
  func.func @transform_6(%arg0: i32, %arg1: i32) -> (i32, i32) {
    %c0_i32 = arith.constant 0 : i32
    %c0_i32_0 = arith.constant 0 : i32
    return %arg0, %c0_i32 : i32, i32
  }
}

</mosaic_0001>

<llo_original>
// kernel: tpu_custom_call.1
$region0: #{tpu_custom_call.1}
  #allocation0 [shape = 'u32[]', space=smem, size = 0x4, offset = 0x4, fixed_abs, tag = 'smem constant byte address 0x4 - core index']
  #allocation1 [shape = 'u32[72,128]{1,0:T(1,128)}', space=vmem, size = 0x9000, scoped, tag = 'internal scratch']
  #allocation2 [shape = 'f32[8,128]{1,0:T(8,128)}', space=vmem, size = 0x1000, scoped, tag = 'scratch operand']
  #allocation3 [shape = 'f32[32,384]{1,0:T(8,128)}', space=vmem, size = 0xc000, scoped, tag = 'scratch operand']
  #allocation4 [shape = 'f32[4,8,128]{2,1,0:T(8,128)}', space=vmem, size = 0x4000, scoped, tag = 'scratch operand']
  %s0 = inlined_call_operand.vmem [shape: s32[16,1], index: 0, kind: input, shape index: {}]
  %s1 = inlined_call_operand.hbm [shape: bf16[2,2,32,64], index: 1, kind: input, shape index: {}]
  %s2 = inlined_call_operand.hbm [shape: bf16[64,384], index: 2, kind: input, shape index: {}]
  %s3 = inlined_call_operand.hbm [shape: bf16[128,384], index: 3, kind: input, shape index: {}]
  %s4 = inlined_call_operand.vmem [shape: f32[1,384], index: 4, kind: input, shape index: {}]
  %s5 = inlined_call_operand.vmem [shape: f32[1,128], index: 5, kind: input, shape index: {}]
  %s6 = inlined_call_operand.hbm [shape: f32[16,128], index: 6, kind: output, shape index: {}]
  %s7 = sld [smem:[#allocation0]]
  $region77: #{tpu_custom_call.1} parent=0
    _
  %s9 = ssub.s32 1, %s7
  %s10 = scalar_select 0, %s9, %s7
  $region1: #{tpu_custom_call.1} parent=0
    #allocation5 [shape = 'u8[16384]{0}', space=vmem, size = 0x4000, scoped, tag = 'input window, operand 1']
    #allocation6 [shape = 's32[2]{0}', space=sflag, size = 0x8, scoped, tag = 'scoped memory for tpu_custom_call.1']
    #allocation7 [shape = 's32[2]{0}', space=sflag, size = 0x8, scoped, tag = 'scoped memory for tpu_custom_call.1']
    #allocation8 [shape = 'u8[49152]{0}', space=vmem, size = 0xc000, scoped, tag = 'input window, operand 2, single buffered']
    #allocation9 [shape = 's32[1]{0}', space=sflag, size = 0x4, scoped, tag = 'scoped memory for tpu_custom_call.1']
    #allocation10 [shape = 'u8[98304]{0}', space=vmem, size = 0x18000, scoped, tag = 'input window, operand 3, single buffered']
    #allocation11 [shape = 'u8[8192]{0}', space=vmem, size = 0x2000, scoped, tag = 'output window, operand 0']
    %11 = vsyncpa [#allocation6], 0
    %s12 = scalar_lea.sflag [#allocation6], 1
    %13 = vsyncpa %s12, 0
    %14 = vsyncpa [#allocation9], 0
    %15 = vsyncpa [#allocation7], 0
    %s16 = scalar_lea.sflag [#allocation7], 1
    %17 = vsyncpa %s16, 0
    loop: start=0, step=1, limit=6
    $region2: #{tpu_custom_call.1} parent=1 // loop_pre_header
      _
    $region3: #{tpu_custom_call.1} parent=1 // loop_header
      %s19 = sphi 0, %s23
      %p20 = scmp.ge.s32.totalorder %s19, 6
      %s26 = sphi 0, %s38
      %s27 = sphi 0, %s34
      %s28 = sphi 0, %s26
      %s29 = sphi 0, %s27
      %s30 = sphi 0, %s28
      %s31 = sphi 0, %s29
      %s41 = sphi 0, %s43
      %s44 = sphi 0, %s41
      %s45 = sphi 0, %s44
      %s61 = sphi 0, %s45
      %s69 = sphi 0, %s71
      %s72 = sphi 0, %s69
      %s73 = sphi 0, %s72
      %s89 = sphi 0, %s73
      %s93 = sphi 0, %s93
      %s95 = sphi 0, %s93
      %s96 = sphi 0, %s95
      %s110 = sphi 0, %s96
      %s114 = sphi 0, %s114
      %s116 = sphi 0, %s114
      %s117 = sphi 0, %s116
      %s131 = sphi 0, %s117
      %s135 = sphi 0, %s135
      %s137 = sphi 0, %s135
      %s138 = sphi 0, %s137
      %s152 = sphi 0, %s138
      %s156 = sphi 0, %s156
      %s158 = sphi 0, %s156
      %s159 = sphi 0, %s158
      %s173 = sphi 0, %s159
      %s179 = sphi 0, %s181
      %s182 = sphi 0, %s179
      %s183 = sphi 0, %s182
      %s199 = sphi 0, %s183
    $region4: #{tpu_custom_call.1} parent=1 // loop_header_branch
      %22 = sbr.rel (%p20) target = $region8
    $region5: #{tpu_custom_call.1} parent=1 // loop_body
      %s24 = ssub.s32 %s19, 1
      %s25 = ssub.s32 %s19, 2
      %s32 = sadd.s32 1, %s27
      %p33 = scmp.ge.s32.totalorder %s32, 2
      %s34 = scalar_select %p33, 0, %s32
      %s35 = sadd.s32 1, %s26
      %s36 = scalar_select %p33, %s35, %s26
      %p37 = scmp.ge.s32.totalorder %s36, 2
      %s38 = scalar_select %p37, 0, %s36
      %s39 = ssub.s32 %s26, %s38
      %p40 = scmp.eq.s32.totalorder %s39, 0
      %s42 = sadd.s32 %s41, 1
      %s43 = scalar_select %p40, %s41, %s42
      %p46 = pneg %p40
      %p47 = scmp.eq.s32.totalorder %s19, 3
      %p48 = por %p46, %p47
      %p49 = scmp.ne.s32.totalorder %s41, %s44
      %p50 = scmp.eq.s32.totalorder %s19, 0
      %p51 = por %p49, %p50
      %p52 = scmp.ne.s32.totalorder %s41, %s44
      %p53 = scmp.eq.s32.totalorder %s24, 3
      %p54 = por %p52, %p53
      %p55 = scmp.ne.s32.totalorder %s44, %s45
      %p56 = scmp.eq.s32.totalorder %s24, 0
      %p57 = por %p55, %p56
      %p58 = scmp.ne.s32.totalorder %s44, %s45
      %p59 = scmp.eq.s32.totalorder %s25, 3
      %p60 = por %p58, %p59
      %p62 = scmp.ne.s32.totalorder %s45, %s61
      %p63 = scmp.eq.s32.totalorder %s25, 0
      %p64 = por %p62, %p63
      %s65 = ssub.s32 %s26, %s38
      %s66 = ssub.s32 %s27, %s34
      %s67 = sor.u32 %s65, %s66
      %p68 = scmp.eq.s32.totalorder %s67, 0
      %s70 = sadd.s32 %s69, 1
      %s71 = scalar_select %p68, %s69, %s70
      %p74 = pneg %p68
      %p75 = scmp.eq.s32.totalorder %s19, 3
      %p76 = por %p74, %p75
      %p77 = scmp.ne.s32.totalorder %s69, %s72
      %p78 = scmp.eq.s32.totalorder %s19, 0
      %p79 = por %p77, %p78
      %p80 = scmp.ne.s32.totalorder %s69, %s72
      %p81 = scmp.eq.s32.totalorder %s24, 3
      %p82 = por %p80, %p81
      %p83 = scmp.ne.s32.totalorder %s72, %s73
      %p84 = scmp.eq.s32.totalorder %s24, 0
      %p85 = por %p83, %p84
      %p86 = scmp.ne.s32.totalorder %s72, %s73
      %p87 = scmp.eq.s32.totalorder %s25, 3
      %p88 = por %p86, %p87
      %p90 = scmp.ne.s32.totalorder %s73, %s89
      %p91 = scmp.eq.s32.totalorder %s25, 0
      %p92 = por %p90, %p91
      %s94 = sadd.s32 %s93, 1
      %p97 = scmp.eq.s32.totalorder %s19, 3
      %p98 = scmp.ne.s32.totalorder %s93, %s95
      %p99 = scmp.eq.s32.totalorder %s19, 0
      %p100 = por %p98, %p99
      %p101 = scmp.ne.s32.totalorder %s93, %s95
      %p102 = scmp.eq.s32.totalorder %s24, 3
      %p103 = por %p101, %p102
      %p104 = scmp.ne.s32.totalorder %s95, %s96
      %p105 = scmp.eq.s32.totalorder %s24, 0
      %p106 = por %p104, %p105
      %p107 = scmp.ne.s32.totalorder %s95, %s96
      %p108 = scmp.eq.s32.totalorder %s25, 3
      %p109 = por %p107, %p108
      %p111 = scmp.ne.s32.totalorder %s96, %s110
      %p112 = scmp.eq.s32.totalorder %s25, 0
      %p113 = por %p111, %p112
      %s115 = sadd.s32 %s114, 1
      %p118 = scmp.eq.s32.totalorder %s19, 3
      %p119 = scmp.ne.s32.totalorder %s114, %s116
      %p120 = scmp.eq.s32.totalorder %s19, 0
      %p121 = por %p119, %p120
      %p122 = scmp.ne.s32.totalorder %s114, %s116
      %p123 = scmp.eq.s32.totalorder %s24, 3
      %p124 = por %p122, %p123
      %p125 = scmp.ne.s32.totalorder %s116, %s117
      %p126 = scmp.eq.s32.totalorder %s24, 0
      %p127 = por %p125, %p126
      %p128 = scmp.ne.s32.totalorder %s116, %s117
      %p129 = scmp.eq.s32.totalorder %s25, 3
      %p130 = por %p128, %p129
      %p132 = scmp.ne.s32.totalorder %s117, %s131
      %p133 = scmp.eq.s32.totalorder %s25, 0
      %p134 = por %p132, %p133
      %s136 = sadd.s32 %s135, 1
      %p139 = scmp.eq.s32.totalorder %s19, 3
      %p140 = scmp.ne.s32.totalorder %s135, %s137
      %p141 = scmp.eq.s32.totalorder %s19, 0
      %p142 = por %p140, %p141
      %p143 = scmp.ne.s32.totalorder %s135, %s137
      %p144 = scmp.eq.s32.totalorder %s24, 3
      %p145 = por %p143, %p144
      %p146 = scmp.ne.s32.totalorder %s137, %s138
      %p147 = scmp.eq.s32.totalorder %s24, 0
      %p148 = por %p146, %p147
      %p149 = scmp.ne.s32.totalorder %s137, %s138
      %p150 = scmp.eq.s32.totalorder %s25, 3
      %p151 = por %p149, %p150
      %p153 = scmp.ne.s32.totalorder %s138, %s152
      %p154 = scmp.eq.s32.totalorder %s25, 0
      %p155 = por %p153, %p154
      %s157 = sadd.s32 %s156, 1
      %p160 = scmp.eq.s32.totalorder %s19, 3
      %p161 = scmp.ne.s32.totalorder %s156, %s158
      %p162 = scmp.eq.s32.totalorder %s19, 0
      %p163 = por %p161, %p162
      %p164 = scmp.ne.s32.totalorder %s156, %s158
      %p165 = scmp.eq.s32.totalorder %s24, 3
      %p166 = por %p164, %p165
      %p167 = scmp.ne.s32.totalorder %s158, %s159
      %p168 = scmp.eq.s32.totalorder %s24, 0
      %p169 = por %p167, %p168
      %p170 = scmp.ne.s32.totalorder %s158, %s159
      %p171 = scmp.eq.s32.totalorder %s25, 3
      %p172 = por %p170, %p171
      %p174 = scmp.ne.s32.totalorder %s159, %s173
      %p175 = scmp.eq.s32.totalorder %s25, 0
      %p176 = por %p174, %p175
      %s177 = ssub.s32 %s26, %s38
      %p178 = scmp.eq.s32.totalorder %s177, 0
      %s180 = sadd.s32 %s179, 1
      %s181 = scalar_select %p178, %s179, %s180
      %p184 = pneg %p178
      %p185 = scmp.eq.s32.totalorder %s19, 3
      %p186 = por %p184, %p185
      %p187 = scmp.ne.s32.totalorder %s179, %s182
      %p188 = scmp.eq.s32.totalorder %s19, 0
      %p189 = por %p187, %p188
      %p190 = scmp.ne.s32.totalorder %s179, %s182
      %p191 = scmp.eq.s32.totalorder %s24, 3
      %p192 = por %p190, %p191
      %p193 = scmp.ne.s32.totalorder %s182, %s183
      %p194 = scmp.eq.s32.totalorder %s24, 0
      %p195 = por %p193, %p194
      %p196 = scmp.ne.s32.totalorder %s182, %s183
      %p197 = scmp.eq.s32.totalorder %s25, 3
      %p198 = por %p196, %p197
      %p200 = scmp.ne.s32.totalorder %s183, %s199
      %p201 = scmp.eq.s32.totalorder %s25, 0
      %p202 = por %p200, %p201
      %p203 = scmp.le.s32.totalorder 1, %s19
      %p204 = scmp.lt.s32.totalorder %s19, 5
      %p205 = pnand %p203, %p204
      %p206 = pneg %p205
      // Predicated region
      $region9: #{tpu_custom_call.1} parent=5 // pred_check
        _
      $region10: #{tpu_custom_call.1} parent=5 // pred_check_branch
        %208 = sbr.rel (%p205) target = $region12
      $region11: #{tpu_custom_call.1} parent=5 // pred_region
        %s209 = ssub.s32 %s19, 1
        // Predicated region
        $region13: #{tpu_custom_call.1} parent=11 // pred_check
          %p210 = pneg %p106
        $region14: #{tpu_custom_call.1} parent=11 // pred_check_branch
          %212 = sbr.rel (%p210) target = $region16
        $region15: #{tpu_custom_call.1} parent=11 // pred_region
          %214 = vsyncadd [#allocation9], 0
          %s215 = sshll.u32 %s2, 4
          %s216 = int_to_ptr.hbm [resolvable:$true] %s215
          %s217 = sshll.u32 [#allocation8], 4
          %s218 = int_to_ptr.vmem [resolvable:$true] %s217
          %223 = dma.hbm_to_vmem [thread:$0]  %s216, 1536, %s218, [#allocation9], 192, 192, 12
        $region16: #{tpu_custom_call.1} parent=11 // pred_fallthru
          _
        // Predicated region
        $region17: #{tpu_custom_call.1} parent=11 // pred_check
          %p224 = pneg %p127
        $region18: #{tpu_custom_call.1} parent=11 // pred_check_branch
          %226 = sbr.rel (%p224) target = $region20
        $region19: #{tpu_custom_call.1} parent=11 // pred_region
          %228 = vsyncadd [#allocation9], 0
          %s229 = sshll.u32 %s3, 4
          %s230 = int_to_ptr.hbm [resolvable:$true] %s229
          %s231 = sshll.u32 [#allocation10], 4
          %s232 = int_to_ptr.vmem [resolvable:$true] %s231
          %237 = dma.hbm_to_vmem [thread:$0]  %s230, 3072, %s232, [#allocation9], 192, 192, 12
        $region20: #{tpu_custom_call.1} parent=11 // pred_fallthru
          _
        // Predicated region
        $region21: #{tpu_custom_call.1} parent=11 // pred_check
          %p238 = pneg %p148
        $region22: #{tpu_custom_call.1} parent=11 // pred_check_branch
          %240 = sbr.rel (%p238) target = $region24
        $region23: #{tpu_custom_call.1} parent=11 // pred_region
          _
        $region24: #{tpu_custom_call.1} parent=11 // pred_fallthru
          _
        // Predicated region
        $region25: #{tpu_custom_call.1} parent=11 // pred_check
          %p241 = pneg %p169
        $region26: #{tpu_custom_call.1} parent=11 // pred_check_branch
          %243 = sbr.rel (%p241) target = $region28
        $region27: #{tpu_custom_call.1} parent=11 // pred_region
          _
        $region28: #{tpu_custom_call.1} parent=11 // pred_fallthru
          _
      $region12: #{tpu_custom_call.1} parent=5 // pred_fallthru
        _
      %p244 = scmp.lt.s32.totalorder %s19, 4
      // Predicated region
      $region29: #{tpu_custom_call.1} parent=5 // pred_check
        %p245 = pneg %p244
      $region30: #{tpu_custom_call.1} parent=5 // pred_check_branch
        %247 = sbr.rel (%p245) target = $region32
      $region31: #{tpu_custom_call.1} parent=5 // pred_region
        // Predicated region
        $region33: #{tpu_custom_call.1} parent=31 // pred_check
          %p248 = pneg %p51
        $region34: #{tpu_custom_call.1} parent=31 // pred_check_branch
          %250 = sbr.rel (%p248) target = $region36
        $region35: #{tpu_custom_call.1} parent=31 // pred_region
          %p251 = scmp.lt.s32.totalorder %s26, 1
          %s252 = scalar_select %p251, %s26, 1
          %s253 = smul.addr %s252, 8
          %s254 = scalar_lea.vmem %s0, %s253
        $region36: #{tpu_custom_call.1} parent=31 // pred_fallthru
          _
        // Predicated region
        $region37: #{tpu_custom_call.1} parent=31 // pred_check
          %p255 = pneg %p79
        $region38: #{tpu_custom_call.1} parent=31 // pred_check_branch
          %257 = sbr.rel (%p255) target = $region40
        $region39: #{tpu_custom_call.1} parent=31 // pred_region
          %s258 = sand.u32 %s69, 1
          %s259 = scalar_lea.sflag [#allocation6], %s258
          %s260 = sand.u32 %s69, 1
          %s261 = smul.addr %s260, 16
          %s262 = scalar_lea.vmem [#allocation5], %s261
          %264 = vsyncadd %s259, 0
          %s265 = smul.addr %s27, 4
          %s266 = smul.addr %s26, 8
          %s267 = sadd.s32 %s265, %s266
          %s268 = smul.addr %s267, 4
          %s269 = scalar_lea.hbm %s1, %s268
          %s270 = sshll.u32 %s269, 4
          %s271 = int_to_ptr.hbm [resolvable:$true] %s270
          %s272 = sshll.u32 %s262, 4
          %s273 = int_to_ptr.vmem [resolvable:$true] %s272
          %278 = dma.hbm_to_vmem [thread:$0]  %s271, 256, %s273, %s259, 64, 64, 4
        $region40: #{tpu_custom_call.1} parent=31 // pred_fallthru
          _
      $region32: #{tpu_custom_call.1} parent=5 // pred_fallthru
        _
      %p279 = scmp.le.s32.totalorder 1, %s19
      %p280 = scmp.lt.s32.totalorder %s19, 5
      %p281 = pnand %p279, %p280
      %p282 = pneg %p281
      // Predicated region
      $region41: #{tpu_custom_call.1} parent=5 // pred_check
        _
      $region42: #{tpu_custom_call.1} parent=5 // pred_check_branch
        %284 = sbr.rel (%p281) target = $region44
      $region43: #{tpu_custom_call.1} parent=5 // pred_region
        %s285 = ssub.s32 %s19, 1
        %s286 = sand.u32 %s72, 1
        %s287 = scalar_lea.sflag [#allocation6], %s286
        %s288 = sand.u32 %s72, 1
        %s289 = smul.addr %s288, 16
        %s290 = scalar_lea.vmem [#allocation5], %s289
        // Predicated region
        $region45: #{tpu_custom_call.1} parent=43 // pred_check
          %p291 = pneg %p85
        $region46: #{tpu_custom_call.1} parent=43 // pred_check_branch
          %293 = sbr.rel (%p291) target = $region48
        $region47: #{tpu_custom_call.1} parent=43 // pred_region
          %295 = dma.done %s287, 256
        $region48: #{tpu_custom_call.1} parent=43 // pred_fallthru
          _
        // Predicated region
        $region49: #{tpu_custom_call.1} parent=43 // pred_check
          %p296 = pneg %p106
        $region50: #{tpu_custom_call.1} parent=43 // pred_check_branch
          %298 = sbr.rel (%p296) target = $region52
        $region51: #{tpu_custom_call.1} parent=43 // pred_region
          %300 = dma.done [#allocation9], 1536
        $region52: #{tpu_custom_call.1} parent=43 // pred_fallthru
          _
        // Predicated region
        $region53: #{tpu_custom_call.1} parent=43 // pred_check
          %p301 = pneg %p127
        $region54: #{tpu_custom_call.1} parent=43 // pred_check_branch
          %303 = sbr.rel (%p301) target = $region56
        $region55: #{tpu_custom_call.1} parent=43 // pred_region
          %305 = dma.done [#allocation9], 3072
        $region56: #{tpu_custom_call.1} parent=43 // pred_fallthru
          _
        %p306 = scmp.lt.s32.totalorder %s28, 1
        %s307 = scalar_select %p306, %s28, 1
        %s308 = smul.addr %s307, 8
        %s309 = scalar_lea.vmem %s0, %s308
        %p310 = pneg %p57
        %p311 = pneg %p54
        %s312 = sand.u32 %s72, 1
        %s313 = scalar_lea.sflag [#allocation6], %s312
        %s314 = sand.u32 %s72, 1
        %s315 = smul.addr %s314, 16
        %s316 = scalar_lea.vmem [#allocation5], %s315
        %p317 = pneg %p85
        %p318 = pneg %p82
        %p319 = pneg %p106
        %p320 = pneg %p103
        %p321 = pneg %p127
        %p322 = pneg %p124
        %p323 = pneg %p148
        %p324 = pneg %p145
        %p325 = pneg %p169
        %p326 = pneg %p166
        %p327 = pneg %p195
        %p328 = pneg %p192
        %s329 = sand.u32 %s182, 1
        %s330 = scalar_lea.sflag [#allocation7], %s329
        %s331 = sand.u32 %s182, 1
        %s332 = smul.addr %s331, 8
        %s333 = scalar_lea.vmem [#allocation11], %s332
        %p334 = scmp.lt.s32.totalorder %s28, 1
        %s335 = scalar_select %p334, %s28, 1
        %s336 = smul.addr %s335, 8
        %s337 = scalar_lea.vmem %s0, %s336
        %p339 = scmp.eq.s32.totalorder %s29, 0
        // Predicated region
        $region57: #{tpu_custom_call.1} parent=43 // pred_check
          %p340 = pneg %p339
        $region58: #{tpu_custom_call.1} parent=43 // pred_check_branch
          %342 = sbr.rel (%p340) target = $region60
        $region59: #{tpu_custom_call.1} parent=43 // pred_region
          %343 = vst [vmem:[#allocation2] sm:$0xff] 0.0
        $region60: #{tpu_custom_call.1} parent=43 // pred_fallthru
          _
        %v344 = vld [vmem:[%s290] sm:$0xf]
        %v345 = vld [vmem:[%s290 + $0x4] sm:$0xf]
        %v346 = vld [vmem:[%s290 + $0x8] sm:$0xf]
        %v347 = vld [vmem:[%s290 + $0xc] sm:$0xf]
        %v348 = vld [vmem:[#allocation8] sm:$0xff]
        %v349 = vld [vmem:[#allocation8 + $0x8] sm:$0xf]
        %v350 = vld [vmem:[#allocation8 + $0xc] sm:$0xff]
        %v351 = vld [vmem:[#allocation8 + $0x14] sm:$0xf]
        %v352 = vld [vmem:[#allocation8 + $0x18] sm:$0xff]
        %v353 = vld [vmem:[#allocation8 + $0x20] sm:$0xf]
        %v354 = vld [vmem:[#allocation8 + $0x24] sm:$0xff]
        %v355 = vld [vmem:[#allocation8 + $0x2c] sm:$0xf]
        %v356 = vld [vmem:[#allocation8 + $0x30] sm:$0xff]
        %v357 = vld [vmem:[#allocation8 + $0x38] sm:$0xf]
        %v358 = vld [vmem:[#allocation8 + $0x3c] sm:$0xff]
        %v359 = vld [vmem:[#allocation8 + $0x44] sm:$0xf]
        %v360 = vld [vmem:[#allocation8 + $0x48] sm:$0xff]
        %v361 = vld [vmem:[#allocation8 + $0x50] sm:$0xf]
        %v362 = vld [vmem:[#allocation8 + $0x54] sm:$0xff]
        %v363 = vld [vmem:[#allocation8 + $0x5c] sm:$0xf]
        %v364 = vld [vmem:[%s4] sm:$0x7]
        %v366 = vperm.slane %v364, 0
        %v367 = vperm.slane %v364, 1
        %v368 = vperm.slane %v364, 2
        %v376 = vunpack.c.l.b16 %v344
        %v377 = vunpack.c.l.b16 %v345
        %v378 = vunpack.c.l.b16 %v346
        %v379 = vunpack.c.l.b16 %v347
        %v380 = vpack.c.b16 %v377, %v376
        %v381 = vpack.c.b16 %v379, %v378
        %v398 = vunpack.c.l.b16 %v348
        %v399 = vunpack.c.h.b16 %v348
        %v400 = vunpack.c.l.b16 %v349
        %v401 = vunpack.c.l.b16 %v350
        %v402 = vunpack.c.h.b16 %v350
        %v403 = vunpack.c.l.b16 %v351
        %v404 = vunpack.c.l.b16 %v352
        %v405 = vunpack.c.h.b16 %v352
        %v406 = vunpack.c.l.b16 %v353
        %v407 = vunpack.c.l.b16 %v354
        %v408 = vunpack.c.h.b16 %v354
        %v409 = vunpack.c.l.b16 %v355
        %v410 = vunpack.c.l.b16 %v356
        %v411 = vunpack.c.h.b16 %v356
        %v412 = vunpack.c.l.b16 %v357
        %v413 = vunpack.c.l.b16 %v358
        %v414 = vunpack.c.h.b16 %v358
        %v415 = vunpack.c.l.b16 %v359
        %v416 = vunpack.c.l.b16 %v360
        %v417 = vunpack.c.h.b16 %v360
        %v418 = vunpack.c.l.b16 %v361
        %v419 = vunpack.c.l.b16 %v362
        %v420 = vunpack.c.h.b16 %v362
        %v421 = vunpack.c.l.b16 %v363
        %v422 = vpack.c.b16 %v401, %v398
        %v423 = vpack.c.b16 %v402, %v399
        %v424 = vpack.c.b16 %v403, %v400
        %v425 = vpack.c.b16 %v407, %v404
        %v426 = vpack.c.b16 %v408, %v405
        %v427 = vpack.c.b16 %v409, %v406
        %v428 = vpack.c.b16 %v413, %v410
        %v429 = vpack.c.b16 %v414, %v411
        %v430 = vpack.c.b16 %v415, %v412
        %v431 = vpack.c.b16 %v419, %v416
        %v432 = vpack.c.b16 %v420, %v417
        %v433 = vpack.c.b16 %v421, %v418
        %vm446 = vcmask 523264
        %v448 = vsel %vm446, %v380, 0
        %v451 = vsel %vm446, %v381, 0
        %453 = vmatpush.bf16.msra.mxu0 0
        %454 = vmatpush.bf16.msra.mxu0 0
        %455 = vmatpush.bf16.msra.mxu0 0
        %456 = vmatpush.bf16.msra.mxu0 0
        %457 = vmatpush.bf16.msra.mxu0 %v431
        %458 = vmatpush.bf16.msra.mxu0 %v428
        %459 = vmatpush.bf16.msra.mxu0 %v425
        %460 = vmatpush.bf16.msra.mxu0 %v422
        %461 = vmatmul.bf16.gmra.mxu0 %v448
        %v462 = vpop.f32.mrf.mxu0
        %v463 = vadd.f32 %v366, %v462
        %v464 = vpop.f32.mrf.mxu0
        %v465 = vadd.f32 %v366, %v464
        %466 = vmatmul.bf16.gmra.mxu0 %v451
        %v467 = vpop.f32.mrf.mxu0
        %v468 = vadd.f32 %v366, %v467
        %v469 = vpop.f32.mrf.mxu0
        %v470 = vadd.f32 %v366, %v469
        %471 = vdwg.mxu0
        %472 = vmatpush.bf16.msra.mxu0 0
        %473 = vmatpush.bf16.msra.mxu0 0
        %474 = vmatpush.bf16.msra.mxu0 0
        %475 = vmatpush.bf16.msra.mxu0 0
        %476 = vmatpush.bf16.msra.mxu0 %v432
        %477 = vmatpush.bf16.msra.mxu0 %v429
        %478 = vmatpush.bf16.msra.mxu0 %v426
        %479 = vmatpush.bf16.msra.mxu0 %v423
        %480 = vmatmul.bf16.gmra.mxu0 %v448
        %v481 = vpop.f32.mrf.mxu0
        %v482 = vadd.f32 %v367, %v481
        %v483 = vpop.f32.mrf.mxu0
        %v484 = vadd.f32 %v367, %v483
        %485 = vmatmul.bf16.gmra.mxu0 %v451
        %v486 = vpop.f32.mrf.mxu0
        %v487 = vadd.f32 %v367, %v486
        %v488 = vpop.f32.mrf.mxu0
        %v489 = vadd.f32 %v367, %v488
        %490 = vdwg.mxu0
        %491 = vmatpush.bf16.msra.mxu0 0
        %492 = vmatpush.bf16.msra.mxu0 0
        %493 = vmatpush.bf16.msra.mxu0 0
        %494 = vmatpush.bf16.msra.mxu0 0
        %495 = vmatpush.bf16.msra.mxu0 %v433
        %496 = vmatpush.bf16.msra.mxu0 %v430
        %497 = vmatpush.bf16.msra.mxu0 %v427
        %498 = vmatpush.bf16.msra.mxu0 %v424
        %499 = vmatmul.bf16.gmra.mxu0 %v448
        %v500 = vpop.f32.mrf.mxu0
        %v501 = vadd.f32 %v368, %v500
        %v502 = vpop.f32.mrf.mxu0
        %v503 = vadd.f32 %v368, %v502
        %504 = vmatmul.bf16.gmra.mxu0 %v451
        %v505 = vpop.f32.mrf.mxu0
        %v506 = vadd.f32 %v368, %v505
        %v507 = vpop.f32.mrf.mxu0
        %v508 = vadd.f32 %v368, %v507
        %509 = vdwg.mxu0
        %510 = vst [vmem:[#allocation3] sm:$0xff] %v463
        %511 = vst [vmem:[#allocation3 + $0x8] sm:$0xff] %v482
        %512 = vst [vmem:[#allocation3 + $0x10] sm:$0xff] %v501
        %513 = vst [vmem:[#allocation3 + $0x18] sm:$0xff] %v465
        %514 = vst [vmem:[#allocation3 + $0x20] sm:$0xff] %v484
        %515 = vst [vmem:[#allocation3 + $0x28] sm:$0xff] %v503
        %516 = vst [vmem:[#allocation3 + $0x30] sm:$0xff] %v468
        %517 = vst [vmem:[#allocation3 + $0x38] sm:$0xff] %v487
        %518 = vst [vmem:[#allocation3 + $0x40] sm:$0xff] %v506
        %519 = vst [vmem:[#allocation3 + $0x48] sm:$0xff] %v470
        %520 = vst [vmem:[#allocation3 + $0x50] sm:$0xff] %v489
        %521 = vst [vmem:[#allocation3 + $0x58] sm:$0xff] %v508
        %s522 = smul.u32 %s29, 4
        %v523 = vstv %s522
        %v524 = vadd.s32 %v523, 1
        %v525 = vadd.s32 %v523, 2
        %v526 = vadd.s32 %v523, 3
        %v527 = vld [vmem:[%s337] sm:$0xff]
        %528 = vset.pattern.permute.xlu0 0
        %529 = vperm.xlu0 %528, %v527
        %v530 = vpop.permute.xlu0 %529
        %vm531 = vcmp.lt.s32.totalorder %v523, %v530
        %vm532 = vcmp.lt.s32.totalorder %v524, %v530
        %vm533 = vcmp.lt.s32.totalorder %v525, %v530
        %vm534 = vcmp.lt.s32.totalorder %v526, %v530
        %v535 = vsel %vm531, 1, 0
        %v536 = vsel %vm532, 1, 0
        %v537 = vsel %vm533, 1, 0
        %v538 = vsel %vm534, 1, 0
        %v539 = vcvt.s32.f32 %v535
        %v540 = vcvt.s32.f32 %v536
        %v541 = vcvt.s32.f32 %v537
        %v542 = vcvt.s32.f32 %v538
        %543 = vst [vmem:[#allocation4] sm:$0xff] %v539
        %544 = vst [vmem:[#allocation4 + $0x8] sm:$0xff] %v540
        %545 = vst [vmem:[#allocation4 + $0x10] sm:$0xff] %v541
        %546 = vst [vmem:[#allocation4 + $0x18] sm:$0xff] %v542
        %v547 = vld [vmem:[#allocation10] sm:$0xff]
        %v548 = vld [vmem:[#allocation10 + $0x8] sm:$0xf]
        %v549 = vld [vmem:[#allocation10 + $0xc] sm:$0xff]
        %v550 = vld [vmem:[#allocation10 + $0x14] sm:$0xf]
        %v551 = vld [vmem:[#allocation10 + $0x18] sm:$0xff]
        %v552 = vld [vmem:[#allocation10 + $0x20] sm:$0xf]
        %v553 = vld [vmem:[#allocation10 + $0x24] sm:$0xff]
        %v554 = vld [vmem:[#allocation10 + $0x2c] sm:$0xf]
        %v555 = vld [vmem:[#allocation10 + $0x30] sm:$0xff]
        %v556 = vld [vmem:[#allocation10 + $0x38] sm:$0xf]
        %v557 = vld [vmem:[#allocation10 + $0x3c] sm:$0xff]
        %v558 = vld [vmem:[#allocation10 + $0x44] sm:$0xf]
        %v559 = vld [vmem:[#allocation10 + $0x48] sm:$0xff]
        %v560 = vld [vmem:[#allocation10 + $0x50] sm:$0xf]
        %v561 = vld [vmem:[#allocation10 + $0x54] sm:$0xff]
        %v562 = vld [vmem:[#allocation10 + $0x5c] sm:$0xf]
        %v563 = vld [vmem:[#allocation10 + $0x60] sm:$0xff]
        %v564 = vld [vmem:[#allocation10 + $0x68] sm:$0xf]
        %v565 = vld [vmem:[#allocation10 + $0x6c] sm:$0xff]
        %v566 = vld [vmem:[#allocation10 + $0x74] sm:$0xf]
        %v567 = vld [vmem:[#allocation10 + $0x78] sm:$0xff]
        %v568 = vld [vmem:[#allocation10 + $0x80] sm:$0xf]
        %v569 = vld [vmem:[#allocation10 + $0x84] sm:$0xff]
        %v570 = vld [vmem:[#allocation10 + $0x8c] sm:$0xf]
        %v571 = vld [vmem:[#allocation10 + $0x90] sm:$0xff]
        %v572 = vld [vmem:[#allocation10 + $0x98] sm:$0xf]
        %v573 = vld [vmem:[#allocation10 + $0x9c] sm:$0xff]
        %v574 = vld [vmem:[#allocation10 + $0xa4] sm:$0xf]
        %v575 = vld [vmem:[#allocation10 + $0xa8] sm:$0xff]
        %v576 = vld [vmem:[#allocation10 + $0xb0] sm:$0xf]
        %v577 = vld [vmem:[#allocation10 + $0xb4] sm:$0xff]
        %v578 = vld [vmem:[#allocation10 + $0xbc] sm:$0xf]
        %v579 = vld [vmem:[%s5] sm:$0x1]
        %v580 = vld [vmem:[#allocation2] sm:$0xff]
        %s581 = smul.u32 0, 3
        %s582 = smul.addr %s581, 8
        %s583 = scalar_lea.vmem [#allocation3], %s582
        %v584 = vld [vmem:[%s583] sm:$0xff]
        %v585 = vld [vmem:[%s583 + $0x8] sm:$0xff]
        %v586 = vld [vmem:[%s583 + $0x10] sm:$0xff]
        %v587 = vpack.c.bf16 %v580, %v580
        %v620 = vunpack.c.l.b16 %v547
        %v621 = vunpack.c.h.b16 %v547
        %v622 = vunpack.c.l.b16 %v548
        %v623 = vunpack.c.l.b16 %v549
        %v624 = vunpack.c.h.b16 %v549
        %v625 = vunpack.c.l.b16 %v550
        %v626 = vunpack.c.l.b16 %v551
        %v627 = vunpack.c.h.b16 %v551
        %v628 = vunpack.c.l.b16 %v552
        %v629 = vunpack.c.l.b16 %v553
        %v630 = vunpack.c.h.b16 %v553
        %v631 = vunpack.c.l.b16 %v554
        %v632 = vunpack.c.l.b16 %v555
        %v633 = vunpack.c.h.b16 %v555
        %v634 = vunpack.c.l.b16 %v556
        %v635 = vunpack.c.l.b16 %v557
        %v636 = vunpack.c.h.b16 %v557
        %v637 = vunpack.c.l.b16 %v558
        %v638 = vunpack.c.l.b16 %v559
        %v639 = vunpack.c.h.b16 %v559
        %v640 = vunpack.c.l.b16 %v560
        %v641 = vunpack.c.l.b16 %v561
        %v642 = vunpack.c.h.b16 %v561
        %v643 = vunpack.c.l.b16 %v562
        %v644 = vunpack.c.l.b16 %v563
        %v645 = vunpack.c.h.b16 %v563
        %v646 = vunpack.c.l.b16 %v564
        %v647 = vunpack.c.l.b16 %v565
        %v648 = vunpack.c.h.b16 %v565
        %v649 = vunpack.c.l.b16 %v566
        %v650 = vunpack.c.l.b16 %v567
        %v651 = vunpack.c.h.b16 %v567
        %v652 = vunpack.c.l.b16 %v568
        %v653 = vunpack.c.l.b16 %v569
        %v654 = vunpack.c.h.b16 %v569
        %v655 = vunpack.c.l.b16 %v570
        %v656 = vunpack.c.l.b16 %v571
        %v657 = vunpack.c.h.b16 %v571
        %v658 = vunpack.c.l.b16 %v572
        %v659 = vunpack.c.l.b16 %v573
        %v660 = vunpack.c.h.b16 %v573
        %v661 = vunpack.c.l.b16 %v574
        %v662 = vunpack.c.l.b16 %v575
        %v663 = vunpack.c.h.b16 %v575
        %v664 = vunpack.c.l.b16 %v576
        %v665 = vunpack.c.l.b16 %v577
        %v666 = vunpack.c.h.b16 %v577
        %v667 = vunpack.c.l.b16 %v578
        %v668 = vpack.c.b16 %v623, %v620
        %v669 = vpack.c.b16 %v624, %v621
        %v670 = vpack.c.b16 %v625, %v622
        %v671 = vpack.c.b16 %v629, %v626
        %v672 = vpack.c.b16 %v630, %v627
        %v673 = vpack.c.b16 %v631, %v628
        %v674 = vpack.c.b16 %v635, %v632
        %v675 = vpack.c.b16 %v636, %v633
        %v676 = vpack.c.b16 %v637, %v634
        %v677 = vpack.c.b16 %v641, %v638
        %v678 = vpack.c.b16 %v642, %v639
        %v679 = vpack.c.b16 %v643, %v640
        %v680 = vpack.c.b16 %v647, %v644
        %v681 = vpack.c.b16 %v648, %v645
        %v682 = vpack.c.b16 %v649, %v646
        %v683 = vpack.c.b16 %v653, %v650
        %v684 = vpack.c.b16 %v654, %v651
        %v685 = vpack.c.b16 %v655, %v652
        %v686 = vpack.c.b16 %v659, %v656
        %v687 = vpack.c.b16 %v660, %v657
        %v688 = vpack.c.b16 %v661, %v658
        %v689 = vpack.c.b16 %v665, %v662
        %v690 = vpack.c.b16 %v666, %v663
        %v691 = vpack.c.b16 %v667, %v664
        %716 = vmatpush.bf16.msra.mxu0 %v689
        %717 = vmatpush.bf16.msra.mxu0 %v686
        %718 = vmatpush.bf16.msra.mxu0 %v683
        %719 = vmatpush.bf16.msra.mxu0 %v680
        %720 = vmatpush.bf16.msra.mxu0 %v677
        %721 = vmatpush.bf16.msra.mxu0 %v674
        %722 = vmatpush.bf16.msra.mxu0 %v671
        %723 = vmatpush.bf16.msra.mxu0 %v668
        %724 = vmatmul.bf16.gmra.mxu0 %v587
        %v725 = vpop.f32.mrf.mxu0
        %v726 = vadd.f32 0.0, %v725
        %v727 = vpop.f32.mrf.mxu0
        %728 = vdwg.mxu0
        %729 = vmatpush.bf16.msra.mxu0 %v690
        %730 = vmatpush.bf16.msra.mxu0 %v687
        %731 = vmatpush.bf16.msra.mxu0 %v684
        %732 = vmatpush.bf16.msra.mxu0 %v681
        %733 = vmatpush.bf16.msra.mxu0 %v678
        %734 = vmatpush.bf16.msra.mxu0 %v675
        %735 = vmatpush.bf16.msra.mxu0 %v672
        %736 = vmatpush.bf16.msra.mxu0 %v669
        %737 = vmatmul.bf16.gmra.mxu0 %v587
        %v738 = vpop.f32.mrf.mxu0
        %v739 = vadd.f32 0.0, %v738
        %v740 = vpop.f32.mrf.mxu0
        %741 = vdwg.mxu0
        %742 = vmatpush.bf16.msra.mxu0 %v691
        %743 = vmatpush.bf16.msra.mxu0 %v688
        %744 = vmatpush.bf16.msra.mxu0 %v685
        %745 = vmatpush.bf16.msra.mxu0 %v682
        %746 = vmatpush.bf16.msra.mxu0 %v679
        %747 = vmatpush.bf16.msra.mxu0 %v676
        %748 = vmatpush.bf16.msra.mxu0 %v673
        %749 = vmatpush.bf16.msra.mxu0 %v670
        %750 = vmatmul.bf16.gmra.mxu0 %v587
        %v751 = vpop.f32.mrf.mxu0
        %v752 = vadd.f32 0.0, %v751
        %v753 = vpop.f32.mrf.mxu0
        %754 = vdwg.mxu0
        %v755 = vadd.f32 %v584, %v726
        %v756 = vxor.u32 %v755, 2147483648
        %v757 = vmul.f32 %v756, 1.442695
        %v758 = vpow.pop %v757
        %v759 = vadd.f32 %v758, 1.0
        %v760 = vrcp.pop %v759
        %v761 = vmul.f32 %v759, %v760
        %v762 = vsub.f32 1.0, %v761
        %v763 = vmul.f32 %v760, %v762
        %v764 = vadd.f32 %v760, %v763
        %vm765 = vweird.f32 %v759
        %vm766 = vweird.f32 %v760
        %vm767 = vmor %vm765, %vm766
        %v768 = vsel %vm767, %v760, %v764
        %v769 = vand.u32 2147483647, %v759
        %vm770 = vcmp.eq.f32.partialorder %v769, 8.507059e+37
        %v771 = vand.u32 %v759, 2147483648
        %v772 = vor.u32 1.1754944e-38, %v771
        %v773 = vsel %vm770, %v772, %v768
        %v774 = vmul.f32 1.0, %v773
        %v775 = vadd.f32 %v585, %v739
        %v776 = vxor.u32 %v775, 2147483648
        %v777 = vmul.f32 %v776, 1.442695
        %v778 = vpow.pop %v777
        %v779 = vadd.f32 %v778, 1.0
        %v780 = vrcp.pop %v779
        %v781 = vmul.f32 %v779, %v780
        %v782 = vsub.f32 1.0, %v781
        %v783 = vmul.f32 %v780, %v782
        %v784 = vadd.f32 %v780, %v783
        %vm785 = vweird.f32 %v779
        %vm786 = vweird.f32 %v780
        %vm787 = vmor %vm785, %vm786
        %v788 = vsel %vm787, %v780, %v784
        %v789 = vand.u32 2147483647, %v779
        %vm790 = vcmp.eq.f32.partialorder %v789, 8.507059e+37
        %v791 = vand.u32 %v779, 2147483648
        %v792 = vor.u32 1.1754944e-38, %v791
        %v793 = vsel %vm790, %v792, %v788
        %v794 = vmul.f32 1.0, %v793
        %v796 = vperm.slane %v579, 0
        %v798 = vadd.f32 %v752, %v796
        %v799 = vmul.f32 %v774, %v798
        %v800 = vadd.f32 %v586, %v799
        %v801 = vtanh.pop %v800
        %v802 = vld [vmem:[#allocation4] sm:$0xff]
        %v803 = vsub.f32 1.0, %v794
        %v804 = vmul.f32 %v802, %v803
        %v805 = vsub.f32 %v801, %v580
        %v806 = vmul.f32 %v804, %v805
        %v807 = vadd.f32 %v580, %v806
        %s808 = smul.u32 1, 3
        %s809 = smul.addr %s808, 8
        %s810 = scalar_lea.vmem [#allocation3], %s809
        %v811 = vld [vmem:[%s810] sm:$0xff]
        %v812 = vld [vmem:[%s810 + $0x8] sm:$0xff]
        %v813 = vld [vmem:[%s810 + $0x10] sm:$0xff]
        %v814 = vpack.c.bf16 %v807, %v807
        %815 = vmatpush.bf16.msra.mxu0 %v689
        %816 = vmatpush.bf16.msra.mxu0 %v686
        %817 = vmatpush.bf16.msra.mxu0 %v683
        %818 = vmatpush.bf16.msra.mxu0 %v680
        %819 = vmatpush.bf16.msra.mxu0 %v677
        %820 = vmatpush.bf16.msra.mxu0 %v674
        %821 = vmatpush.bf16.msra.mxu0 %v671
        %822 = vmatpush.bf16.msra.mxu0 %v668
        %823 = vmatmul.bf16.gmra.mxu0 %v814
        %v824 = vpop.f32.mrf.mxu0
        %v825 = vadd.f32 0.0, %v824
        %v826 = vpop.f32.mrf.mxu0
        %827 = vdwg.mxu0
        %828 = vmatpush.bf16.msra.mxu0 %v690
        %829 = vmatpush.bf16.msra.mxu0 %v687
        %830 = vmatpush.bf16.msra.mxu0 %v684
        %831 = vmatpush.bf16.msra.mxu0 %v681
        %832 = vmatpush.bf16.msra.mxu0 %v678
        %833 = vmatpush.bf16.msra.mxu0 %v675
        %834 = vmatpush.bf16.msra.mxu0 %v672
        %835 = vmatpush.bf16.msra.mxu0 %v669
        %836 = vmatmul.bf16.gmra.mxu0 %v814
        %v837 = vpop.f32.mrf.mxu0
        %v838 = vadd.f32 0.0, %v837
        %v839 = vpop.f32.mrf.mxu0
        %840 = vdwg.mxu0
        %841 = vmatpush.bf16.msra.mxu0 %v691
        %842 = vmatpush.bf16.msra.mxu0 %v688
        %843 = vmatpush.bf16.msra.mxu0 %v685
        %844 = vmatpush.bf16.msra.mxu0 %v682
        %845 = vmatpush.bf16.msra.mxu0 %v679
        %846 = vmatpush.bf16.msra.mxu0 %v676
        %847 = vmatpush.bf16.msra.mxu0 %v673
        %848 = vmatpush.bf16.msra.mxu0 %v670
        %849 = vmatmul.bf16.gmra.mxu0 %v814
        %v850 = vpop.f32.mrf.mxu0
        %v851 = vadd.f32 0.0, %v850
        %v852 = vpop.f32.mrf.mxu0
        %853 = vdwg.mxu0
        %v854 = vadd.f32 %v811, %v825
        %v855 = vxor.u32 %v854, 2147483648
        %v856 = vmul.f32 %v855, 1.442695
        %v857 = vpow.pop %v856
        %v858 = vadd.f32 %v857, 1.0
        %v859 = vrcp.pop %v858
        %v860 = vmul.f32 %v858, %v859
        %v861 = vsub.f32 1.0, %v860
        %v862 = vmul.f32 %v859, %v861
        %v863 = vadd.f32 %v859, %v862
        %vm864 = vweird.f32 %v858
        %vm865 = vweird.f32 %v859
        %vm866 = vmor %vm864, %vm865
        %v867 = vsel %vm866, %v859, %v863
        %v868 = vand.u32 2147483647, %v858
        %vm869 = vcmp.eq.f32.partialorder %v868, 8.507059e+37
        %v870 = vand.u32 %v858, 2147483648
        %v871 = vor.u32 1.1754944e-38, %v870
        %v872 = vsel %vm869, %v871, %v867
        %v873 = vmul.f32 1.0, %v872
        %v874 = vadd.f32 %v812, %v838
        %v875 = vxor.u32 %v874, 2147483648
        %v876 = vmul.f32 %v875, 1.442695
        %v877 = vpow.pop %v876
        %v878 = vadd.f32 %v877, 1.0
        %v879 = vrcp.pop %v878
        %v880 = vmul.f32 %v878, %v879
        %v881 = vsub.f32 1.0, %v880
        %v882 = vmul.f32 %v879, %v881
        %v883 = vadd.f32 %v879, %v882
        %vm884 = vweird.f32 %v878
        %vm885 = vweird.f32 %v879
        %vm886 = vmor %vm884, %vm885
        %v887 = vsel %vm886, %v879, %v883
        %v888 = vand.u32 2147483647, %v878
        %vm889 = vcmp.eq.f32.partialorder %v888, 8.507059e+37
        %v890 = vand.u32 %v878, 2147483648
        %v891 = vor.u32 1.1754944e-38, %v890
        %v892 = vsel %vm889, %v891, %v887
        %v893 = vmul.f32 1.0, %v892
        %v894 = vadd.f32 %v851, %v796
        %v895 = vmul.f32 %v873, %v894
        %v896 = vadd.f32 %v813, %v895
        %v897 = vtanh.pop %v896
        %s898 = scalar_lea.vmem [#allocation4], 8
        %v899 = vld [vmem:[%s898] sm:$0xff]
        %v900 = vsub.f32 1.0, %v893
        %v901 = vmul.f32 %v899, %v900
        %v902 = vsub.f32 %v897, %v807
        %v903 = vmul.f32 %v901, %v902
        %v904 = vadd.f32 %v807, %v903
        %s905 = smul.u32 2, 3
        %s906 = smul.addr %s905, 8
        %s907 = scalar_lea.vmem [#allocation3], %s906
        %v908 = vld [vmem:[%s907] sm:$0xff]
        %v909 = vld [vmem:[%s907 + $0x8] sm:$0xff]
        %v910 = vld [vmem:[%s907 + $0x10] sm:$0xff]
        %v911 = vpack.c.bf16 %v904, %v904
        %912 = vmatpush.bf16.msra.mxu0 %v689
        %913 = vmatpush.bf16.msra.mxu0 %v686
        %914 = vmatpush.bf16.msra.mxu0 %v683
        %915 = vmatpush.bf16.msra.mxu0 %v680
        %916 = vmatpush.bf16.msra.mxu0 %v677
        %917 = vmatpush.bf16.msra.mxu0 %v674
        %918 = vmatpush.bf16.msra.mxu0 %v671
        %919 = vmatpush.bf16.msra.mxu0 %v668
        %920 = vmatmul.bf16.gmra.mxu0 %v911
        %v921 = vpop.f32.mrf.mxu0
        %v922 = vadd.f32 0.0, %v921
        %v923 = vpop.f32.mrf.mxu0
        %924 = vdwg.mxu0
        %925 = vmatpush.bf16.msra.mxu0 %v690
        %926 = vmatpush.bf16.msra.mxu0 %v687
        %927 = vmatpush.bf16.msra.mxu0 %v684
        %928 = vmatpush.bf16.msra.mxu0 %v681
        %929 = vmatpush.bf16.msra.mxu0 %v678
        %930 = vmatpush.bf16.msra.mxu0 %v675
        %931 = vmatpush.bf16.msra.mxu0 %v672
        %932 = vmatpush.bf16.msra.mxu0 %v669
        %933 = vmatmul.bf16.gmra.mxu0 %v911
        %v934 = vpop.f32.mrf.mxu0
        %v935 = vadd.f32 0.0, %v934
        %v936 = vpop.f32.mrf.mxu0
        %937 = vdwg.mxu0
        %938 = vmatpush.bf16.msra.mxu0 %v691
        %939 = vmatpush.bf16.msra.mxu0 %v688
        %940 = vmatpush.bf16.msra.mxu0 %v685
        %941 = vmatpush.bf16.msra.mxu0 %v682
        %942 = vmatpush.bf16.msra.mxu0 %v679
        %943 = vmatpush.bf16.msra.mxu0 %v676
        %944 = vmatpush.bf16.msra.mxu0 %v673
        %945 = vmatpush.bf16.msra.mxu0 %v670
        %946 = vmatmul.bf16.gmra.mxu0 %v911
        %v947 = vpop.f32.mrf.mxu0
        %v948 = vadd.f32 0.0, %v947
        %v949 = vpop.f32.mrf.mxu0
        %950 = vdwg.mxu0
        %v951 = vadd.f32 %v908, %v922
        %v952 = vxor.u32 %v951, 2147483648
        %v953 = vmul.f32 %v952, 1.442695
        %v954 = vpow.pop %v953
        %v955 = vadd.f32 %v954, 1.0
        %v956 = vrcp.pop %v955
        %v957 = vmul.f32 %v955, %v956
        %v958 = vsub.f32 1.0, %v957
        %v959 = vmul.f32 %v956, %v958
        %v960 = vadd.f32 %v956, %v959
        %vm961 = vweird.f32 %v955
        %vm962 = vweird.f32 %v956
        %vm963 = vmor %vm961, %vm962
        %v964 = vsel %vm963, %v956, %v960
        %v965 = vand.u32 2147483647, %v955
        %vm966 = vcmp.eq.f32.partialorder %v965, 8.507059e+37
        %v967 = vand.u32 %v955, 2147483648
        %v968 = vor.u32 1.1754944e-38, %v967
        %v969 = vsel %vm966, %v968, %v964
        %v970 = vmul.f32 1.0, %v969
        %v971 = vadd.f32 %v909, %v935
        %v972 = vxor.u32 %v971, 2147483648
        %v973 = vmul.f32 %v972, 1.442695
        %v974 = vpow.pop %v973
        %v975 = vadd.f32 %v974, 1.0
        %v976 = vrcp.pop %v975
        %v977 = vmul.f32 %v975, %v976
        %v978 = vsub.f32 1.0, %v977
        %v979 = vmul.f32 %v976, %v978
        %v980 = vadd.f32 %v976, %v979
        %vm981 = vweird.f32 %v975
        %vm982 = vweird.f32 %v976
        %vm983 = vmor %vm981, %vm982
        %v984 = vsel %vm983, %v976, %v980
        %v985 = vand.u32 2147483647, %v975
        %vm986 = vcmp.eq.f32.partialorder %v985, 8.507059e+37
        %v987 = vand.u32 %v975, 2147483648
        %v988 = vor.u32 1.1754944e-38, %v987
        %v989 = vsel %vm986, %v988, %v984
        %v990 = vmul.f32 1.0, %v989
        %v991 = vadd.f32 %v948, %v796
        %v992 = vmul.f32 %v970, %v991
        %v993 = vadd.f32 %v910, %v992
        %v994 = vtanh.pop %v993
        %s995 = scalar_lea.vmem [#allocation4], 16
        %v996 = vld [vmem:[%s995] sm:$0xff]
        %v997 = vsub.f32 1.0, %v990
        %v998 = vmul.f32 %v996, %v997
        %v999 = vsub.f32 %v994, %v904
        %v1000 = vmul.f32 %v998, %v999
        %v1001 = vadd.f32 %v904, %v1000
        %s1002 = smul.u32 3, 3
        %s1003 = smul.addr %s1002, 8
        %s1004 = scalar_lea.vmem [#allocation3], %s1003
        %v1005 = vld [vmem:[%s1004] sm:$0xff]
        %v1006 = vld [vmem:[%s1004 + $0x8] sm:$0xff]
        %v1007 = vld [vmem:[%s1004 + $0x10] sm:$0xff]
        %v1008 = vpack.c.bf16 %v1001, %v1001
        %1009 = vmatpush.bf16.msra.mxu0 %v689
        %1010 = vmatpush.bf16.msra.mxu0 %v686
        %1011 = vmatpush.bf16.msra.mxu0 %v683
        %1012 = vmatpush.bf16.msra.mxu0 %v680
        %1013 = vmatpush.bf16.msra.mxu0 %v677
        %1014 = vmatpush.bf16.msra.mxu0 %v674
        %1015 = vmatpush.bf16.msra.mxu0 %v671
        %1016 = vmatpush.bf16.msra.mxu0 %v668
        %1017 = vmatmul.bf16.gmra.mxu0 %v1008
        %v1018 = vpop.f32.mrf.mxu0
        %v1019 = vadd.f32 0.0, %v1018
        %v1020 = vpop.f32.mrf.mxu0
        %1021 = vdwg.mxu0
        %1022 = vmatpush.bf16.msra.mxu0 %v690
        %1023 = vmatpush.bf16.msra.mxu0 %v687
        %1024 = vmatpush.bf16.msra.mxu0 %v684
        %1025 = vmatpush.bf16.msra.mxu0 %v681
        %1026 = vmatpush.bf16.msra.mxu0 %v678
        %1027 = vmatpush.bf16.msra.mxu0 %v675
        %1028 = vmatpush.bf16.msra.mxu0 %v672
        %1029 = vmatpush.bf16.msra.mxu0 %v669
        %1030 = vmatmul.bf16.gmra.mxu0 %v1008
        %v1031 = vpop.f32.mrf.mxu0
        %v1032 = vadd.f32 0.0, %v1031
        %v1033 = vpop.f32.mrf.mxu0
        %1034 = vdwg.mxu0
        %1035 = vmatpush.bf16.msra.mxu0 %v691
        %1036 = vmatpush.bf16.msra.mxu0 %v688
        %1037 = vmatpush.bf16.msra.mxu0 %v685
        %1038 = vmatpush.bf16.msra.mxu0 %v682
        %1039 = vmatpush.bf16.msra.mxu0 %v679
        %1040 = vmatpush.bf16.msra.mxu0 %v676
        %1041 = vmatpush.bf16.msra.mxu0 %v673
        %1042 = vmatpush.bf16.msra.mxu0 %v670
        %1043 = vmatmul.bf16.gmra.mxu0 %v1008
        %v1044 = vpop.f32.mrf.mxu0
        %v1045 = vadd.f32 0.0, %v1044
        %v1046 = vpop.f32.mrf.mxu0
        %1047 = vdwg.mxu0
        %v1048 = vadd.f32 %v1005, %v1019
        %v1049 = vxor.u32 %v1048, 2147483648
        %v1050 = vmul.f32 %v1049, 1.442695
        %v1051 = vpow.pop %v1050
        %v1052 = vadd.f32 %v1051, 1.0
        %v1053 = vrcp.pop %v1052
        %v1054 = vmul.f32 %v1052, %v1053
        %v1055 = vsub.f32 1.0, %v1054
        %v1056 = vmul.f32 %v1053, %v1055
        %v1057 = vadd.f32 %v1053, %v1056
        %vm1058 = vweird.f32 %v1052
        %vm1059 = vweird.f32 %v1053
        %vm1060 = vmor %vm1058, %vm1059
        %v1061 = vsel %vm1060, %v1053, %v1057
        %v1062 = vand.u32 2147483647, %v1052
        %vm1063 = vcmp.eq.f32.partialorder %v1062, 8.507059e+37
        %v1064 = vand.u32 %v1052, 2147483648
        %v1065 = vor.u32 1.1754944e-38, %v1064
        %v1066 = vsel %vm1063, %v1065, %v1061
        %v1067 = vmul.f32 1.0, %v1066
        %v1068 = vadd.f32 %v1006, %v1032
        %v1069 = vxor.u32 %v1068, 2147483648
        %v1070 = vmul.f32 %v1069, 1.442695
        %v1071 = vpow.pop %v1070
        %v1072 = vadd.f32 %v1071, 1.0
        %v1073 = vrcp.pop %v1072
        %v1074 = vmul.f32 %v1072, %v1073
        %v1075 = vsub.f32 1.0, %v1074
        %v1076 = vmul.f32 %v1073, %v1075
        %v1077 = vadd.f32 %v1073, %v1076
        %vm1078 = vweird.f32 %v1072
        %vm1079 = vweird.f32 %v1073
        %vm1080 = vmor %vm1078, %vm1079
        %v1081 = vsel %vm1080, %v1073, %v1077
        %v1082 = vand.u32 2147483647, %v1072
        %vm1083 = vcmp.eq.f32.partialorder %v1082, 8.507059e+37
        %v1084 = vand.u32 %v1072, 2147483648
        %v1085 = vor.u32 1.1754944e-38, %v1084
        %v1086 = vsel %vm1083, %v1085, %v1081
        %v1087 = vmul.f32 1.0, %v1086
        %v1088 = vadd.f32 %v1045, %v796
        %v1089 = vmul.f32 %v1067, %v1088
        %v1090 = vadd.f32 %v1007, %v1089
        %v1091 = vtanh.pop %v1090
        %s1092 = scalar_lea.vmem [#allocation4], 24
        %v1093 = vld [vmem:[%s1092] sm:$0xff]
        %v1094 = vsub.f32 1.0, %v1087
        %v1095 = vmul.f32 %v1093, %v1094
        %v1096 = vsub.f32 %v1091, %v1001
        %v1097 = vmul.f32 %v1095, %v1096
        %v1098 = vadd.f32 %v1001, %v1097
        %1099 = vst [vmem:[#allocation2] sm:$0xff] %v1098
        %p1100 = scmp.eq.s32.totalorder %s29, 1
        // Predicated region
        $region61: #{tpu_custom_call.1} parent=43 // pred_check
          %p1101 = pneg %p1100
        $region62: #{tpu_custom_call.1} parent=43 // pred_check_branch
          %1103 = sbr.rel (%p1101) target = $region64
        $region63: #{tpu_custom_call.1} parent=43 // pred_region
          %v1104 = vld [vmem:[#allocation2] sm:$0xff]
          %v1105 = vmul.f32 %v1104, %v1104
          %1106 = vadd.xlane.f32.xlu0 %v1105
          %v1107 = vpop.xlane.xlu0 %1106
          %v1108 = vrsqrt.pop %v1107
          %v1109 = vmul.f32 %v1108, %v1107
          %v1110 = vmul.f32 %v1109, %v1108
          %v1111 = vmul.f32 0.5, %v1110
          %v1112 = vsub.f32 1.5, %v1111
          %v1113 = vmul.f32 %v1108, %v1112
          %vm1114 = vweird.f32 %v1107
          %vm1115 = vweird.f32 %v1108
          %vm1116 = vmor %vm1114, %vm1115
          %v1117 = vsel %vm1116, %v1108, %v1113
          %v1118 = vmul.f32 %v1104, %v1117
          %1119 = vst [vmem:[%s333] sm:$0xff] %v1118
        $region64: #{tpu_custom_call.1} parent=43 // pred_fallthru
          _
        %s1120 = sand.u32 %s182, 1
        %s1121 = scalar_lea.sflag [#allocation7], %s1120
        %s1122 = sand.u32 %s182, 1
        %s1123 = smul.addr %s1122, 8
        %s1124 = scalar_lea.vmem [#allocation11], %s1123
        // Predicated region
        $region65: #{tpu_custom_call.1} parent=43 // pred_check
          %p1125 = pneg %p192
        $region66: #{tpu_custom_call.1} parent=43 // pred_check_branch
          %1127 = sbr.rel (%p1125) target = $region68
        $region67: #{tpu_custom_call.1} parent=43 // pred_region
          %1129 = vsyncadd %s1121, 0
          %s1130 = smul.addr %s28, 8
          %s1131 = scalar_lea.hbm %s6, %s1130
          %s1133 = sshll.u32 %s1124, 4
          %s1134 = int_to_ptr.vmem [resolvable:$true] %s1133
          %s1135 = sshll.u32 %s1131, 4
          %s1136 = int_to_ptr.hbm [resolvable:$true] %s1135
          %1138 = dma.vmem_to_hbm [thread:$0]  %s1134, 128, %s1136, %s1121
        $region68: #{tpu_custom_call.1} parent=43 // pred_fallthru
          _
      $region44: #{tpu_custom_call.1} parent=5 // pred_fallthru
        _
      %p1139 = scmp.le.s32.totalorder 2, %s19
      // Predicated region
      $region69: #{tpu_custom_call.1} parent=5 // pred_check
        %p1140 = pneg %p1139
      $region70: #{tpu_custom_call.1} parent=5 // pred_check_branch
        %1142 = sbr.rel (%p1140) target = $region72
      $region71: #{tpu_custom_call.1} parent=5 // pred_region
        %s1143 = ssub.s32 %s19, 2
        // Predicated region
        $region73: #{tpu_custom_call.1} parent=71 // pred_check
          %p1144 = pneg %p198
        $region74: #{tpu_custom_call.1} parent=71 // pred_check_branch
          %1146 = sbr.rel (%p1144) target = $region76
        $region75: #{tpu_custom_call.1} parent=71 // pred_region
          %s1147 = sand.u32 %s183, 1
          %s1148 = scalar_lea.sflag [#allocation7], %s1147
          %s1149 = sand.u32 %s183, 1
          %s1150 = smul.addr %s1149, 8
          %s1151 = scalar_lea.vmem [#allocation11], %s1150
          %1153 = dma.done %s1148, 128
        $region76: #{tpu_custom_call.1} parent=71 // pred_fallthru
          _
      $region72: #{tpu_custom_call.1} parent=5 // pred_fallthru
        _
    $region6: #{tpu_custom_call.1} parent=1 // loop_footer
      %s23 = sadd.s32 1, %s19
    $region7: #{tpu_custom_call.1} parent=1 // loop_footer_branch
      %18 = sbr.rel target = $region3
    $region8: #{tpu_custom_call.1} parent=1 // loop_exit
      _
    %1154 = vsyncpa [#allocation6], 1
    %s1155 = scalar_lea.sflag [#allocation6], 1
    %1156 = vsyncpa %s1155, 1
    %1157 = vsyncpa [#allocation9], 1
    %1158 = vsyncpa [#allocation7], 1
    %s1159 = scalar_lea.sflag [#allocation7], 1
    %1160 = vsyncpa %s1159, 1

</llo_original>
